<compile_context>
chip_gen: v5e
topology: v5e:2x2
jax: 0.10.0
libtpu: 0.0.40
codegen_flags: <defaults>
</compile_context>

<pallas_src>
import jax
import jax.numpy as jnp
from jax.experimental import pallas as pl
from jax.experimental.pallas import tpu as pltpu


def qnetwork_kernel(xt_ref, w1_ref, w2_ref, smalls_ref, b3_ref, o_ref):
    f32, bf16 = jnp.float32, jnp.bfloat16

    b1 = smalls_ref[0]                     # (H, 1) f32
    b2 = smalls_ref[1]                     # (H, 1) f32
    w3 = smalls_ref[2]                     # (H, 1) f32 (fc3 weight as a column)

    # --- fc1 (concat already fused into w1 / xt): (H,Kp)@(Kp,TB) + b1, ReLU ---
    xt = xt_ref[...].astype(bf16)                                   # (Kp, TB)
    h1 = jnp.dot(w1_ref[...], xt, preferred_element_type=f32) + b1  # (H, TB) f32
    h1 = jnp.maximum(h1, 0.0)

    # --- fc2: bf16 MXU matmul, f32 accumulate / bias / ReLU ---
    h2 = jnp.dot(w2_ref[...], h1.astype(bf16),
                 preferred_element_type=f32) + b2                   # (H, TB) f32
    h2 = jnp.maximum(h2, 0.0)

    # --- fc3 (out_features == 1): VPU multiply + XLU sublane-reduce.  Result is
    #     born lane-dense (1, TB); stored with unmasked full-lane stores.
    out = jnp.sum(h2 * w3, axis=0, keepdims=True) + b3_ref[0, 0]    # (1, TB)
    o_ref[...] = out.astype(o_ref.dtype)


def _batch_tile(B, block_b):
    """Pick the batch (lane) tile.

    B <= 256: one whole-batch tile (full-dim block, any B legal).
    Larger B : at least two tiles (keeps both v7x TensorCores busy), capped at
               block_b, rounded up to a multiple of 128 (lane-dim block rule).
    """
    if B <= 256:
        return B
    half = -(-B // 2)                       # ceil(B / 2)
    tb = min(block_b, half)
    tb = max(128, ((tb + 127) // 128) * 128)
    return tb


def qnetwork_forward(x, a, params, *, block_b=512):
    """x: (B, obs_dim) f32, a: (B, act_dim) f32 -> (B, 1) f32."""
    w1, w2, smalls, b3 = params
    B = x.shape[0]
    K = x.shape[1] + a.shape[1]
    H, Kp = w1.shape

    # Layout plumbing (one small XLA pass over the tiny activations): fuse the
    # torch.cat, zero-pad K up to the bf16 sublane tile (matches w1's zero
    # columns), and go feature-major so every kernel matmul is standard
    # orientation and the output is lane-dense.
    cat = jnp.concatenate([x, a], axis=1)                 # (B, K)
    if Kp > K:
        cat = jnp.pad(cat, ((0, 0), (0, Kp - K)))
    xt = cat.T                                            # (Kp, B) f32

    TB = _batch_tile(B, block_b)
    grid = (pl.cdiv(B, TB),)

    out = pl.pallas_call(
        qnetwork_kernel,
        out_shape=jax.ShapeDtypeStruct((1, B), jnp.float32),
        grid=grid,
        in_specs=[
            # activations, batch-tiled along lanes; ragged tail = partial block
            pl.BlockSpec((Kp, TB), lambda i: (0, i)),
            # weights / packed small params: constant block index -> DMA'd once,
            # VMEM-resident across all batch tiles.
            pl.BlockSpec((H, Kp), lambda i: (0, 0)),
            pl.BlockSpec((H, H), lambda i: (0, 0)),
            pl.BlockSpec((3, H, 1), lambda i: (0, 0, 0)),   # [b1 | b2 | w3]
            # fc3 bias as a scalar in SMEM (no padded VMEM tile, no extra DMA)
            pl.BlockSpec(memory_space=pltpu.MemorySpace.SMEM),
        ],
        out_specs=pl.BlockSpec((1, TB), lambda i: (0, i)),   # lane-dense output
        compiler_params=pltpu.CompilerParams(
            dimension_semantics=("parallel",)),   # shards batch tiles on v7x
    )(xt, w1, w2, smalls, b3)

    return out.reshape(B, 1)   # (1, B) and (B, 1) share the same memory layout


def init_params(key, obs_dim, act_dim, hidden=256):
    """Deterministic init in kernel layout.

    w1: (hidden, Kp) bf16, K = obs_dim + act_dim zero-padded to a multiple of 16
    w2: (hidden, hidden) bf16
    smalls: (3, hidden, 1) f32 = stacked [b1, b2, w3]
    b3: (1, 1) f32
    """
    K = obs_dim + act_dim
    Kp = max(16, ((K + 15) // 16) * 16)
    k1, k2, k3, k4, k5, k6 = jax.random.split(key, 6)

    def uinit(k, shape, fan_in):
        bound = 1.0 / (fan_in ** 0.5)
        return jax.random.uniform(k, shape, jnp.float32, -bound, bound)

    w1 = uinit(k1, (hidden, K), K)
    w1 = jnp.pad(w1, ((0, 0), (0, Kp - K))).astype(jnp.bfloat16)
    b1 = uinit(k2, (hidden, 1), K)
    w2 = uinit(k3, (hidden, hidden), hidden).astype(jnp.bfloat16)
    b2 = uinit(k4, (hidden, 1), hidden)
    w3 = uinit(k5, (hidden, 1), hidden)
    b3 = uinit(k6, (1, 1), hidden)
    smalls = jnp.stack([b1, b2, w3], axis=0)              # (3, hidden, 1) f32
    return (w1, w2, smalls, b3)


def qnetwork_ref(x, a, params):
    """Plain-JAX reference mirroring the kernel's bf16-weight / f32-acc math."""
    w1, w2, smalls, b3 = params
    f32, bf16 = jnp.float32, jnp.bfloat16
    Kp = w1.shape[1]
    cat = jnp.concatenate([x, a], axis=1)
    cat = jnp.pad(cat, ((0, 0), (0, Kp - cat.shape[1])))
    xt = cat.T
    b1, b2, w3 = smalls[0], smalls[1], smalls[2]
    h1 = jnp.maximum(jnp.dot(w1, xt.astype(bf16),
                             preferred_element_type=f32) + b1, 0.0)
    h2 = jnp.maximum(jnp.dot(w2, h1.astype(bf16),
                             preferred_element_type=f32) + b2, 0.0)
    out = jnp.sum(h2 * w3, axis=0, keepdims=True) + b3[0, 0]
    return out.reshape(-1, 1)


if __name__ == "__main__":
    key = jax.random.PRNGKey(0)
    k_obs, k_act, k_par = jax.random.split(key, 3)

    # Shapes consistent with a MuJoCo-style env (obs=17, act=6).  B=640 with the
    # default block_b=512 exercises 2 batch tiles (parallel axis) including a
    # ragged last tile with no wrapper-side batch padding.
    B, OBS_DIM, ACT_DIM = 640, 17, 6
    x = jax.random.normal(k_obs, (B, OBS_DIM), jnp.float32)
    a = jax.random.normal(k_act, (B, ACT_DIM), jnp.float32)
    params = init_params(k_par, OBS_DIM, ACT_DIM)

    out = jax.jit(qnetwork_forward)(x, a, params)
    out = jax.block_until_ready(out)

    ref = qnetwork_ref(x, a, params)
    assert out.shape == (B, 1)
    max_err = float(jnp.max(jnp.abs(out - ref)))
    assert jnp.allclose(out, ref, atol=1e-2, rtol=1e-2), max_err

    print("KERNEL_OK")
</pallas_src>

<mosaic_0001>
module attributes {stable_mosaic.version = 11 : i64} {
  func.func @qnetwork_kernel(%arg0: i32, %arg1: memref<32x384xf32, #tpu.memory_space<vmem>>, %arg2: memref<256x32xbf16, #tpu.memory_space<vmem>>, %arg3: memref<256x256xbf16, #tpu.memory_space<vmem>>, %arg4: memref<3x256x1xf32, #tpu.memory_space<vmem>>, %arg5: memref<1x1xf32, #tpu.memory_space<smem>>, %arg6: memref<1x384xf32, #tpu.memory_space<vmem>>) attributes {dimension_semantics = [#tpu.dimension_semantics<parallel>], iteration_bounds = array<i64: 2>, scalar_prefetch = 0 : i64, scratch_operands = 0 : i64, tpu.core_type = #tpu.core_type<tc>, window_params = [{transform_indices = @transform_0, window_bounds = array<i64: 32, 384>}, {pipeline_mode = #tpu.pipeline_mode<synchronous>, transform_indices = @transform_1, window_bounds = array<i64: 256, 32>}, {pipeline_mode = #tpu.pipeline_mode<synchronous>, transform_indices = @transform_2, window_bounds = array<i64: 256, 256>}, {pipeline_mode = #tpu.pipeline_mode<synchronous>, transform_indices = @transform_3, window_bounds = array<i64: 3, 256, 1>}, {transform_indices = @transform_4, window_bounds = array<i64: 1, 1>}, {transform_indices = @transform_5, window_bounds = array<i64: 1, 384>}]} {
    %c0 = arith.constant 0 : index
    %c0_0 = arith.constant 0 : index
    %c0_1 = arith.constant 0 : index
    %0 = vector.load %arg4[%c0, %c0_0, %c0_1] : memref<3x256x1xf32, #tpu.memory_space<vmem>>, vector<1x256x1xf32>
    %1 = vector.shape_cast %0 : vector<1x256x1xf32> to vector<256x1xf32>
    %c1 = arith.constant 1 : index
    %c0_2 = arith.constant 0 : index
    %c0_3 = arith.constant 0 : index
    %2 = vector.load %arg4[%c1, %c0_2, %c0_3] : memref<3x256x1xf32, #tpu.memory_space<vmem>>, vector<1x256x1xf32>
    %3 = vector.shape_cast %2 : vector<1x256x1xf32> to vector<256x1xf32>
    %c2 = arith.constant 2 : index
    %c0_4 = arith.constant 0 : index
    %c0_5 = arith.constant 0 : index
    %4 = vector.load %arg4[%c2, %c0_4, %c0_5] : memref<3x256x1xf32, #tpu.memory_space<vmem>>, vector<1x256x1xf32>
    %5 = vector.shape_cast %4 : vector<1x256x1xf32> to vector<256x1xf32>
    %c0_6 = arith.constant 0 : index
    %c0_7 = arith.constant 0 : index
    %6 = vector.load %arg1[%c0_6, %c0_7] : memref<32x384xf32, #tpu.memory_space<vmem>>, vector<32x384xf32>
    %7 = arith.truncf %6 : vector<32x384xf32> to vector<32x384xbf16>
    %c0_8 = arith.constant 0 : index
    %c0_9 = arith.constant 0 : index
    %8 = vector.load %arg2[%c0_8, %c0_9] : memref<256x32xbf16, #tpu.memory_space<vmem>>, vector<256x32xbf16>
    %cst = arith.constant dense<0.000000e+00> : vector<256x384xf32>
    %9 = tpu.matmul %8, %7, %cst {dimension_numbers = #tpu.dot_dimension_numbers<[1], [0], [0], [1], [0, 0, 1, 1], [], []>} : vector<256x32xbf16>, vector<32x384xbf16>, vector<256x384xf32> -> vector<256x384xf32>
    %10 = vector.broadcast %1 : vector<256x1xf32> to vector<256x384xf32>
    %11 = arith.addf %9, %10 : vector<256x384xf32>
    %cst_10 = arith.constant 0.000000e+00 : f32
    %12 = vector.broadcast %cst_10 : f32 to vector<256x384xf32>
    %13 = arith.maximumf %11, %12 : vector<256x384xf32>
    %c0_11 = arith.constant 0 : index
    %c0_12 = arith.constant 0 : index
    %14 = vector.load %arg3[%c0_11, %c0_12] : memref<256x256xbf16, #tpu.memory_space<vmem>>, vector<256x256xbf16>
    %15 = arith.truncf %13 : vector<256x384xf32> to vector<256x384xbf16>
    %cst_13 = arith.constant dense<0.000000e+00> : vector<256x384xf32>
    %16 = tpu.matmul %14, %15, %cst_13 {dimension_numbers = #tpu.dot_dimension_numbers<[1], [0], [0], [1], [0, 0, 1, 1], [], []>} : vector<256x256xbf16>, vector<256x384xbf16>, vector<256x384xf32> -> vector<256x384xf32>
    %17 = vector.broadcast %3 : vector<256x1xf32> to vector<256x384xf32>
    %18 = arith.addf %16, %17 : vector<256x384xf32>
    %cst_14 = arith.constant 0.000000e+00 : f32
    %19 = vector.broadcast %cst_14 : f32 to vector<256x384xf32>
    %20 = arith.maximumf %18, %19 : vector<256x384xf32>
    %21 = vector.broadcast %5 : vector<256x1xf32> to vector<256x384xf32>
    %22 = arith.mulf %20, %21 : vector<256x384xf32>
    %cst_15 = arith.constant dense<0.000000e+00> : vector<384xf32>
    %23 = vector.multi_reduction <add>, %22, %cst_15 [0] : vector<256x384xf32> to vector<384xf32>
    %24 = vector.shape_cast %23 : vector<384xf32> to vector<1x384xf32>
    %c0_16 = arith.constant 0 : index
    %c0_17 = arith.constant 0 : index
    %25 = memref.load %arg5[%c0_16, %c0_17] : memref<1x1xf32, #tpu.memory_space<smem>>
    %26 = vector.broadcast %25 : f32 to vector<1x384xf32>
    %27 = arith.addf %24, %26 : vector<1x384xf32>
    %c0_18 = arith.constant 0 : index
    %c0_19 = arith.constant 0 : index
    %28 = vector.load %arg6[%c0_18, %c0_19] : memref<1x384xf32, #tpu.memory_space<vmem>>, vector<1x384xf32>
    tpu.vector_store %arg6[%c0_18, %c0_19], %27 {strides = array<i32>} : memref<1x384xf32, #tpu.memory_space<vmem>>, vector<1x384xf32>,
    return
  }
  func.func @transform_0(%arg0: i32) -> (i32, i32) {
    %c0_i32 = arith.constant 0 : i32
    %c0_i32_0 = arith.constant 0 : i32
    return %c0_i32, %arg0 : i32, i32
  }
  func.func @transform_1(%arg0: i32) -> (i32, i32) {
    %c0_i32 = arith.constant 0 : i32
    %c0_i32_0 = arith.constant 0 : i32
    %c0_i32_1 = arith.constant 0 : i32
    return %c0_i32, %c0_i32_0 : i32, i32
  }
  func.func @transform_2(%arg0: i32) -> (i32, i32) {
    %c0_i32 = arith.constant 0 : i32
    %c0_i32_0 = arith.constant 0 : i32
    %c0_i32_1 = arith.constant 0 : i32
    return %c0_i32, %c0_i32_0 : i32, i32
  }
  func.func @transform_3(%arg0: i32) -> (i32, i32, i32) {
    %c0_i32 = arith.constant 0 : i32
    %c0_i32_0 = arith.constant 0 : i32
    %c0_i32_1 = arith.constant 0 : i32
    %c0_i32_2 = arith.constant 0 : i32
    return %c0_i32, %c0_i32_0, %c0_i32_1 : i32, i32, i32
  }
  func.func @transform_4(%arg0: i32) -> (i32, i32) {
    %c0_i32 = arith.constant 0 : i32
    %c0_i32_0 = arith.constant 0 : i32
    %c0_i32_1 = arith.constant 0 : i32
    return %c0_i32, %c0_i32_0 : i32, i32
  }
  func.func @transform_5(%arg0: i32) -> (i32, i32) {
    %c0_i32 = arith.constant 0 : i32
    %c0_i32_0 = arith.constant 0 : i32
    return %c0_i32, %arg0 : i32, i32
  }
}

</mosaic_0001>

<llo_original>
// kernel: qnetwork_forward.1
$region0: #{qnetwork_forward.1}
  #allocation0 [shape = 'u32[]', space=smem, size = 0x4, offset = 0x4, fixed_abs, tag = 'smem constant byte address 0x4 - core index']
  #allocation1 [shape = 'u32[72,128]{1,0:T(1,128)}', space=vmem, size = 0x9000, scoped, tag = 'internal scratch']
  #allocation2 [shape = 'f32[1,1]{1,0:T(1,128)S(6)}', space=smem, size = 0x200, scoped, tag = 'scoped memory for qnetwork_forward.1']
  %s0 = inlined_call_operand.vmem [shape: f32[32,640], index: 0, kind: input, shape index: {}]
  %s1 = inlined_call_operand.vmem [shape: bf16[256,32], index: 1, kind: input, shape index: {}]
  %s2 = inlined_call_operand.vmem [shape: bf16[256,256], index: 2, kind: input, shape index: {}]
  %s3 = inlined_call_operand.vmem [shape: f32[3,256,1], index: 3, kind: input, shape index: {}]
  %s4 = inlined_call_operand.<no memory space> [shape: f32[1,1], index: 4, kind: input, shape index: {}]
  %s5 = inlined_call_operand.hbm [shape: f32[1,640], index: 5, kind: output, shape index: {}]
  %s6 = sld [smem:[#allocation0]]
  $region119: #{qnetwork_forward.1} parent=0
    _
  %s8 = ssub.s32 1, %s6
  %s9 = scalar_select 0, %s8, %s6
  %10 = sst [smem:[#allocation2]] %s4
  $region1: #{qnetwork_forward.1} parent=0
    #allocation3 [shape = 'u8[98304]{0}', space=vmem, size = 0x18000, scoped, tag = 'input window, operand 0']
    #allocation4 [shape = 'u8[3072]{0}', space=vmem, size = 0xc00, scoped, tag = 'output window, operand 0']
    #allocation5 [shape = 's32[2]{0}', space=sflag, size = 0x8, scoped, tag = 'scoped memory for qnetwork_forward.1']
    %11 = vsyncpa [#allocation5], 0
    %s12 = scalar_lea.sflag [#allocation5], 1
    %13 = vsyncpa %s12, 0
    loop: start=0, step=1, limit=4
    $region2: #{qnetwork_forward.1} parent=1 // loop_pre_header
      _
    $region3: #{qnetwork_forward.1} parent=1 // loop_header
      %s15 = sphi 0, %s19
      %p16 = scmp.ge.s32.totalorder %s15, 4
      %s25 = sphi 0, %s27
      %s28 = sphi 0, %s25
      %s29 = sphi 0, %s28
      %s45 = sphi 0, %s29
      %s49 = sphi 0, %s49
      %s51 = sphi 0, %s49
      %s52 = sphi 0, %s51
      %s66 = sphi 0, %s52
      %s70 = sphi 0, %s70
      %s72 = sphi 0, %s70
      %s73 = sphi 0, %s72
      %s87 = sphi 0, %s73
      %s91 = sphi 0, %s91
      %s93 = sphi 0, %s91
      %s94 = sphi 0, %s93
      %s108 = sphi 0, %s94
      %s112 = sphi 0, %s112
      %s114 = sphi 0, %s112
      %s115 = sphi 0, %s114
      %s129 = sphi 0, %s115
      %s135 = sphi 0, %s137
      %s138 = sphi 0, %s135
      %s139 = sphi 0, %s138
      %s155 = sphi 0, %s139
    $region4: #{qnetwork_forward.1} parent=1 // loop_header_branch
      %18 = sbr.rel (%p16) target = $region8
    $region5: #{qnetwork_forward.1} parent=1 // loop_body
      %s20 = ssub.s32 %s15, 1
      %s21 = ssub.s32 %s15, 2
      %s22 = sadd.s32 %s15, 1
      %s23 = ssub.s32 %s15, %s22
      %p24 = scmp.eq.s32.totalorder %s23, 0
      %s26 = sadd.s32 %s25, 1
      %s27 = scalar_select %p24, %s25, %s26
      %p30 = pneg %p24
      %p31 = scmp.eq.s32.totalorder %s15, 1
      %p32 = por %p30, %p31
      %p33 = scmp.ne.s32.totalorder %s25, %s28
      %p34 = scmp.eq.s32.totalorder %s15, 0
      %p35 = por %p33, %p34
      %p36 = scmp.ne.s32.totalorder %s25, %s28
      %p37 = scmp.eq.s32.totalorder %s20, 1
      %p38 = por %p36, %p37
      %p39 = scmp.ne.s32.totalorder %s28, %s29
      %p40 = scmp.eq.s32.totalorder %s20, 0
      %p41 = por %p39, %p40
      %p42 = scmp.ne.s32.totalorder %s28, %s29
      %p43 = scmp.eq.s32.totalorder %s21, 1
      %p44 = por %p42, %p43
      %p46 = scmp.ne.s32.totalorder %s29, %s45
      %p47 = scmp.eq.s32.totalorder %s21, 0
      %p48 = por %p46, %p47
      %s50 = sadd.s32 %s49, 1
      %p53 = scmp.eq.s32.totalorder %s15, 1
      %p54 = scmp.ne.s32.totalorder %s49, %s51
      %p55 = scmp.eq.s32.totalorder %s15, 0
      %p56 = por %p54, %p55
      %p57 = scmp.ne.s32.totalorder %s49, %s51
      %p58 = scmp.eq.s32.totalorder %s20, 1
      %p59 = por %p57, %p58
      %p60 = scmp.ne.s32.totalorder %s51, %s52
      %p61 = scmp.eq.s32.totalorder %s20, 0
      %p62 = por %p60, %p61
      %p63 = scmp.ne.s32.totalorder %s51, %s52
      %p64 = scmp.eq.s32.totalorder %s21, 1
      %p65 = por %p63, %p64
      %p67 = scmp.ne.s32.totalorder %s52, %s66
      %p68 = scmp.eq.s32.totalorder %s21, 0
      %p69 = por %p67, %p68
      %s71 = sadd.s32 %s70, 1
      %p74 = scmp.eq.s32.totalorder %s15, 1
      %p75 = scmp.ne.s32.totalorder %s70, %s72
      %p76 = scmp.eq.s32.totalorder %s15, 0
      %p77 = por %p75, %p76
      %p78 = scmp.ne.s32.totalorder %s70, %s72
      %p79 = scmp.eq.s32.totalorder %s20, 1
      %p80 = por %p78, %p79
      %p81 = scmp.ne.s32.totalorder %s72, %s73
      %p82 = scmp.eq.s32.totalorder %s20, 0
      %p83 = por %p81, %p82
      %p84 = scmp.ne.s32.totalorder %s72, %s73
      %p85 = scmp.eq.s32.totalorder %s21, 1
      %p86 = por %p84, %p85
      %p88 = scmp.ne.s32.totalorder %s73, %s87
      %p89 = scmp.eq.s32.totalorder %s21, 0
      %p90 = por %p88, %p89
      %s92 = sadd.s32 %s91, 1
      %p95 = scmp.eq.s32.totalorder %s15, 1
      %p96 = scmp.ne.s32.totalorder %s91, %s93
      %p97 = scmp.eq.s32.totalorder %s15, 0
      %p98 = por %p96, %p97
      %p99 = scmp.ne.s32.totalorder %s91, %s93
      %p100 = scmp.eq.s32.totalorder %s20, 1
      %p101 = por %p99, %p100
      %p102 = scmp.ne.s32.totalorder %s93, %s94
      %p103 = scmp.eq.s32.totalorder %s20, 0
      %p104 = por %p102, %p103
      %p105 = scmp.ne.s32.totalorder %s93, %s94
      %p106 = scmp.eq.s32.totalorder %s21, 1
      %p107 = por %p105, %p106
      %p109 = scmp.ne.s32.totalorder %s94, %s108
      %p110 = scmp.eq.s32.totalorder %s21, 0
      %p111 = por %p109, %p110
      %s113 = sadd.s32 %s112, 1
      %p116 = scmp.eq.s32.totalorder %s15, 1
      %p117 = scmp.ne.s32.totalorder %s112, %s114
      %p118 = scmp.eq.s32.totalorder %s15, 0
      %p119 = por %p117, %p118
      %p120 = scmp.ne.s32.totalorder %s112, %s114
      %p121 = scmp.eq.s32.totalorder %s20, 1
      %p122 = por %p120, %p121
      %p123 = scmp.ne.s32.totalorder %s114, %s115
      %p124 = scmp.eq.s32.totalorder %s20, 0
      %p125 = por %p123, %p124
      %p126 = scmp.ne.s32.totalorder %s114, %s115
      %p127 = scmp.eq.s32.totalorder %s21, 1
      %p128 = por %p126, %p127
      %p130 = scmp.ne.s32.totalorder %s115, %s129
      %p131 = scmp.eq.s32.totalorder %s21, 0
      %p132 = por %p130, %p131
      %s133 = ssub.s32 %s15, %s22
      %p134 = scmp.eq.s32.totalorder %s133, 0
      %s136 = sadd.s32 %s135, 1
      %s137 = scalar_select %p134, %s135, %s136
      %p140 = pneg %p134
      %p141 = scmp.eq.s32.totalorder %s15, 1
      %p142 = por %p140, %p141
      %p143 = scmp.ne.s32.totalorder %s135, %s138
      %p144 = scmp.eq.s32.totalorder %s15, 0
      %p145 = por %p143, %p144
      %p146 = scmp.ne.s32.totalorder %s135, %s138
      %p147 = scmp.eq.s32.totalorder %s20, 1
      %p148 = por %p146, %p147
      %p149 = scmp.ne.s32.totalorder %s138, %s139
      %p150 = scmp.eq.s32.totalorder %s20, 0
      %p151 = por %p149, %p150
      %p152 = scmp.ne.s32.totalorder %s138, %s139
      %p153 = scmp.eq.s32.totalorder %s21, 1
      %p154 = por %p152, %p153
      %p156 = scmp.ne.s32.totalorder %s139, %s155
      %p157 = scmp.eq.s32.totalorder %s21, 0
      %p158 = por %p156, %p157
      %p159 = scmp.le.s32.totalorder 1, %s15
      %p160 = scmp.lt.s32.totalorder %s15, 3
      %p161 = pnand %p159, %p160
      %p162 = pneg %p161
      // Predicated region
      $region9: #{qnetwork_forward.1} parent=5 // pred_check
        _
      $region10: #{qnetwork_forward.1} parent=5 // pred_check_branch
        %164 = sbr.rel (%p161) target = $region12
      $region11: #{qnetwork_forward.1} parent=5 // pred_region
        %s165 = ssub.s32 %s15, 1
        // Predicated region
        $region13: #{qnetwork_forward.1} parent=11 // pred_check
          %p166 = pneg %p62
        $region14: #{qnetwork_forward.1} parent=11 // pred_check_branch
          %168 = sbr.rel (%p166) target = $region16
        $region15: #{qnetwork_forward.1} parent=11 // pred_region
          _
        $region16: #{qnetwork_forward.1} parent=11 // pred_fallthru
          _
        // Predicated region
        $region17: #{qnetwork_forward.1} parent=11 // pred_check
          %p169 = pneg %p83
        $region18: #{qnetwork_forward.1} parent=11 // pred_check_branch
          %171 = sbr.rel (%p169) target = $region20
        $region19: #{qnetwork_forward.1} parent=11 // pred_region
          _
        $region20: #{qnetwork_forward.1} parent=11 // pred_fallthru
          _
        // Predicated region
        $region21: #{qnetwork_forward.1} parent=11 // pred_check
          %p172 = pneg %p104
        $region22: #{qnetwork_forward.1} parent=11 // pred_check_branch
          %174 = sbr.rel (%p172) target = $region24
        $region23: #{qnetwork_forward.1} parent=11 // pred_region
          _
        $region24: #{qnetwork_forward.1} parent=11 // pred_fallthru
          _
        // Predicated region
        $region25: #{qnetwork_forward.1} parent=11 // pred_check
          %p175 = pneg %p125
        $region26: #{qnetwork_forward.1} parent=11 // pred_check_branch
          %177 = sbr.rel (%p175) target = $region28
        $region27: #{qnetwork_forward.1} parent=11 // pred_region
          _
        $region28: #{qnetwork_forward.1} parent=11 // pred_fallthru
          _
      $region12: #{qnetwork_forward.1} parent=5 // pred_fallthru
        _
      %p178 = scmp.lt.s32.totalorder %s15, 2
      // Predicated region
      $region29: #{qnetwork_forward.1} parent=5 // pred_check
        %p179 = pneg %p178
      $region30: #{qnetwork_forward.1} parent=5 // pred_check_branch
        %181 = sbr.rel (%p179) target = $region32
      $region31: #{qnetwork_forward.1} parent=5 // pred_region
        // Predicated region
        $region33: #{qnetwork_forward.1} parent=31 // pred_check
          %p182 = pneg %p35
        $region34: #{qnetwork_forward.1} parent=31 // pred_check_branch
          %184 = sbr.rel (%p182) target = $region36
        $region35: #{qnetwork_forward.1} parent=31 // pred_region
          %s185 = sand.u32 %s25, 1
          %s186 = sand.u32 %s25, 1
          %s187 = smul.addr %s186, 96
          %s188 = scalar_lea.vmem [#allocation3], %s187
          %s189 = smul.u32 3, %s15
          %s190 = ssub.s32 5, %s189
          %p191 = scmp.lt.s32.totalorder %s190, 3
          %s192 = scalar_select %p191, %s190, 3
          %s193 = smul.u32 32, %s192
          %p194 = scmp.ne.s32.totalorder 0, %s193
          %s195 = smul.addr %s189, 8
          %s196 = scalar_lea.vmem %s0, %s195
          %s197 = smul.u32 %s192, 8
          // Predicated region
          $region37: #{qnetwork_forward.1} parent=35 // pred_check
            %p198 = pneg %p194
          $region38: #{qnetwork_forward.1} parent=35 // pred_check_branch
            %200 = sbr.rel (%p198) target = $region40
          $region39: #{qnetwork_forward.1} parent=35 // pred_region
            %p201 = scmp.lt.u32.totalorder %s197, 8
            %p202 = pneg %p201
            // Predicated region
            $region41: #{qnetwork_forward.1} parent=39 // pred_check
              _
            $region42: #{qnetwork_forward.1} parent=39 // pred_check_branch
              %204 = sbr.rel (%p201) target = $region44
            $region43: #{qnetwork_forward.1} parent=39 // pred_region
              %s226 = sand.u32 %s197, 7
              %p227 = scmp.eq.s32.totalorder %s226, 0
              // Predicated region
              $region56: #{qnetwork_forward.1} parent=43 // pred_check
                %p228 = pneg %p227
              $region57: #{qnetwork_forward.1} parent=43 // pred_check_branch
                %230 = sbr.rel (%p228) target = $region59
              $region58: #{qnetwork_forward.1} parent=43 // pred_region
                %s231 = sshrl.u32 %s197, 3
                %s232 = sshrl.u32 %s231, 3
                // While loop
                $region60: #{qnetwork_forward.1} parent=58 // loop_pre_header
                  _
                $region61: #{qnetwork_forward.1} parent=58 // loop_header
                  %s234 = sphi 0, %s236
                  %p235 = scmp.ge.s32.totalorder %s234, %s232
                  %s239 = sphi 0, %s308
                  %s240 = sphi %s196, %s311
                  %s241 = sphi %s188, %s312
                $region62: #{qnetwork_forward.1} parent=58 // loop_header_branch
                  %238 = sbr.rel (%p235) target = $region66
                $region63: #{qnetwork_forward.1} parent=58 // loop_body
                  %v242 = vld [vmem:[%s240] sm:$0xff]
                  %243 = vst [vmem:[%s241] sm:$0xff] %v242
                  %v244 = vld [vmem:[%s240 + $0x8] sm:$0xff]
                  %245 = vst [vmem:[%s241 + $0x8] sm:$0xff] %v244
                  %v246 = vld [vmem:[%s240 + $0x10] sm:$0xff]
                  %247 = vst [vmem:[%s241 + $0x10] sm:$0xff] %v246
                  %v248 = vld [vmem:[%s240 + $0x18] sm:$0xff]
                  %249 = vst [vmem:[%s241 + $0x18] sm:$0xff] %v248
                  %v250 = vld [vmem:[%s240 + $0x20] sm:$0xff]
                  %251 = vst [vmem:[%s241 + $0x20] sm:$0xff] %v250
                  %v252 = vld [vmem:[%s240 + $0x28] sm:$0xff]
                  %253 = vst [vmem:[%s241 + $0x28] sm:$0xff] %v252
                  %v254 = vld [vmem:[%s240 + $0x30] sm:$0xff]
                  %255 = vst [vmem:[%s241 + $0x30] sm:$0xff] %v254
                  %v256 = vld [vmem:[%s240 + $0x38] sm:$0xff]
                  %257 = vst [vmem:[%s241 + $0x38] sm:$0xff] %v256
                  %v258 = vld [vmem:[%s240 + $0x28] sm:$0xff]
                  %259 = vst [vmem:[%s241 + $0x18] sm:$0xff] %v258
                  %v260 = vld [vmem:[%s240 + $0x30] sm:$0xff]
                  %261 = vst [vmem:[%s241 + $0x20] sm:$0xff] %v260
                  %v262 = vld [vmem:[%s240 + $0x38] sm:$0xff]
                  %263 = vst [vmem:[%s241 + $0x28] sm:$0xff] %v262
                  %v264 = vld [vmem:[%s240 + $0x40] sm:$0xff]
                  %265 = vst [vmem:[%s241 + $0x30] sm:$0xff] %v264
                  %v266 = vld [vmem:[%s240 + $0x48] sm:$0xff]
                  %267 = vst [vmem:[%s241 + $0x38] sm:$0xff] %v266
                  %v268 = vld [vmem:[%s240 + $0x50] sm:$0xff]
                  %269 = vst [vmem:[%s241 + $0x40] sm:$0xff] %v268
                  %v270 = vld [vmem:[%s240 + $0x58] sm:$0xff]
                  %271 = vst [vmem:[%s241 + $0x48] sm:$0xff] %v270
                  %v272 = vld [vmem:[%s240 + $0x60] sm:$0xff]
                  %273 = vst [vmem:[%s241 + $0x50] sm:$0xff] %v272
                  %v274 = vld [vmem:[%s240 + $0x50] sm:$0xff]
                  %275 = vst [vmem:[%s241 + $0x30] sm:$0xff] %v274
                  %v276 = vld [vmem:[%s240 + $0x58] sm:$0xff]
                  %277 = vst [vmem:[%s241 + $0x38] sm:$0xff] %v276
                  %v278 = vld [vmem:[%s240 + $0x60] sm:$0xff]
                  %279 = vst [vmem:[%s241 + $0x40] sm:$0xff] %v278
                  %v280 = vld [vmem:[%s240 + $0x68] sm:$0xff]
                  %281 = vst [vmem:[%s241 + $0x48] sm:$0xff] %v280
                  %v282 = vld [vmem:[%s240 + $0x70] sm:$0xff]
                  %283 = vst [vmem:[%s241 + $0x50] sm:$0xff] %v282
                  %v284 = vld [vmem:[%s240 + $0x78] sm:$0xff]
                  %285 = vst [vmem:[%s241 + $0x58] sm:$0xff] %v284
                  %v286 = vld [vmem:[%s240 + $0x80] sm:$0xff]
                  %287 = vst [vmem:[%s241 + $0x60] sm:$0xff] %v286
                  %v288 = vld [vmem:[%s240 + $0x88] sm:$0xff]
                  %289 = vst [vmem:[%s241 + $0x68] sm:$0xff] %v288
                  %v290 = vld [vmem:[%s240 + $0x78] sm:$0xff]
                  %291 = vst [vmem:[%s241 + $0x48] sm:$0xff] %v290
                  %v292 = vld [vmem:[%s240 + $0x80] sm:$0xff]
                  %293 = vst [vmem:[%s241 + $0x50] sm:$0xff] %v292
                  %v294 = vld [vmem:[%s240 + $0x88] sm:$0xff]
                  %295 = vst [vmem:[%s241 + $0x58] sm:$0xff] %v294
                  %v296 = vld [vmem:[%s240 + $0x90] sm:$0xff]
                  %297 = vst [vmem:[%s241 + $0x60] sm:$0xff] %v296
                  %v298 = vld [vmem:[%s240 + $0x98] sm:$0xff]
                  %299 = vst [vmem:[%s241 + $0x68] sm:$0xff] %v298
                  %v300 = vld [vmem:[%s240 + $0xa0] sm:$0xff]
                  %301 = vst [vmem:[%s241 + $0x70] sm:$0xff] %v300
                  %v302 = vld [vmem:[%s240 + $0xa8] sm:$0xff]
                  %303 = vst [vmem:[%s241 + $0x78] sm:$0xff] %v302
                  %v304 = vld [vmem:[%s240 + $0xb0] sm:$0xff]
                  %305 = vst [vmem:[%s241 + $0x80] sm:$0xff] %v304
                  %s306 = sadd.s32 1, %s239
                  %p307 = scmp.ge.s32.totalorder %s306, %s232
                  %s308 = scalar_select %p307, 0, %s306
                  %s309 = smul.u32 %s308, 64
                  %s310 = smul.u32 %s308, 64
                  %s311 = scalar_lea.vmem %s196, %s309
                  %s312 = scalar_lea.vmem %s188, %s310 [#allocation3]
                $region64: #{qnetwork_forward.1} parent=58 // loop_footer
                  %s236 = sadd.s32 %s234, 1
                $region65: #{qnetwork_forward.1} parent=58 // loop_footer_branch
                  %233 = sbr.rel target = $region61
                $region66: #{qnetwork_forward.1} parent=58 // loop_exit
                  _
                %s313 = sshrl.u32 %s231, 3
                %s314 = sand.u32 %s231, 7
                %s315 = smul.u32 %s313, 8
                %s316 = smul.u32 8, %s315
                %s317 = scalar_lea.vmem %s196, %s316
                %s318 = smul.u32 8, %s315
                %s319 = scalar_lea.vmem %s188, %s318 [#allocation3]
                // While loop
                $region67: #{qnetwork_forward.1} parent=58 // loop_pre_header
                  _
                $region68: #{qnetwork_forward.1} parent=58 // loop_header
                  %s321 = sphi 0, %s323
                  %p322 = scmp.ge.s32.totalorder %s321, %s314
                  %s326 = sphi 0, %s339
                  %s327 = sphi %s317, %s342
                  %s328 = sphi %s319, %s343
                $region69: #{qnetwork_forward.1} parent=58 // loop_header_branch
                  %325 = sbr.rel (%p322) target = $region73
                $region70: #{qnetwork_forward.1} parent=58 // loop_body
                  %v329 = vld [vmem:[%s327] sm:$0xff]
                  %330 = vst [vmem:[%s328] sm:$0xff] %v329
                  %v331 = vld [vmem:[%s327 + $0x28] sm:$0xff]
                  %332 = vst [vmem:[%s328 + $0x18] sm:$0xff] %v331
                  %v333 = vld [vmem:[%s327 + $0x50] sm:$0xff]
                  %334 = vst [vmem:[%s328 + $0x30] sm:$0xff] %v333
                  %v335 = vld [vmem:[%s327 + $0x78] sm:$0xff]
                  %336 = vst [vmem:[%s328 + $0x48] sm:$0xff] %v335
                  %s337 = sadd.s32 1, %s326
                  %p338 = scmp.ge.s32.totalorder %s337, %s314
                  %s339 = scalar_select %p338, 0, %s337
                  %s340 = smul.u32 %s339, 8
                  %s341 = smul.u32 %s339, 8
                  %s342 = scalar_lea.vmem %s317, %s340
                  %s343 = scalar_lea.vmem %s319, %s341 [#allocation3]
                $region71: #{qnetwork_forward.1} parent=58 // loop_footer
                  %s323 = sadd.s32 %s321, 1
                $region72: #{qnetwork_forward.1} parent=58 // loop_footer_branch
                  %320 = sbr.rel target = $region68
                $region73: #{qnetwork_forward.1} parent=58 // loop_exit
                  _
              $region59: #{qnetwork_forward.1} parent=43 // pred_fallthru
                _
              %p344 = pneg %p227
              // Predicated region
              $region74: #{qnetwork_forward.1} parent=43 // pred_check
                _
              $region75: #{qnetwork_forward.1} parent=43 // pred_check_branch
                %346 = sbr.rel (%p227) target = $region77
              $region76: #{qnetwork_forward.1} parent=43 // pred_region
                %s347 = sand.u32 %s197, 7
                %s348 = ssub.s32 %s197, %s347
                %s349 = scalar_lea.vmem %s196, %s348
                %s350 = ssub.s32 %s197, %s347
                %s351 = scalar_lea.vmem %s188, %s350 [#allocation3]
                %s352 = sshrl.u32 %s197, 3
                %s353 = sshrl.u32 %s352, 3
                // While loop
                $region78: #{qnetwork_forward.1} parent=76 // loop_pre_header
                  _
                $region79: #{qnetwork_forward.1} parent=76 // loop_header
                  %s355 = sphi 0, %s357
                  %p356 = scmp.ge.s32.totalorder %s355, %s353
                  %s360 = sphi 0, %s429
                  %s361 = sphi %s196, %s432
                  %s362 = sphi %s188, %s433
                $region80: #{qnetwork_forward.1} parent=76 // loop_header_branch
                  %359 = sbr.rel (%p356) target = $region84
                $region81: #{qnetwork_forward.1} parent=76 // loop_body
                  %v363 = vld [vmem:[%s361] sm:$0xff]
                  %364 = vst [vmem:[%s362] sm:$0xff] %v363
                  %v365 = vld [vmem:[%s361 + $0x8] sm:$0xff]
                  %366 = vst [vmem:[%s362 + $0x8] sm:$0xff] %v365
                  %v367 = vld [vmem:[%s361 + $0x10] sm:$0xff]
                  %368 = vst [vmem:[%s362 + $0x10] sm:$0xff] %v367
                  %v369 = vld [vmem:[%s361 + $0x18] sm:$0xff]
                  %370 = vst [vmem:[%s362 + $0x18] sm:$0xff] %v369
                  %v371 = vld [vmem:[%s361 + $0x20] sm:$0xff]
                  %372 = vst [vmem:[%s362 + $0x20] sm:$0xff] %v371
                  %v373 = vld [vmem:[%s361 + $0x28] sm:$0xff]
                  %374 = vst [vmem:[%s362 + $0x28] sm:$0xff] %v373
                  %v375 = vld [vmem:[%s361 + $0x30] sm:$0xff]
                  %376 = vst [vmem:[%s362 + $0x30] sm:$0xff] %v375
                  %v377 = vld [vmem:[%s361 + $0x38] sm:$0xff]
                  %378 = vst [vmem:[%s362 + $0x38] sm:$0xff] %v377
                  %v379 = vld [vmem:[%s361 + $0x28] sm:$0xff]
                  %380 = vst [vmem:[%s362 + $0x18] sm:$0xff] %v379
                  %v381 = vld [vmem:[%s361 + $0x30] sm:$0xff]
                  %382 = vst [vmem:[%s362 + $0x20] sm:$0xff] %v381
                  %v383 = vld [vmem:[%s361 + $0x38] sm:$0xff]
                  %384 = vst [vmem:[%s362 + $0x28] sm:$0xff] %v383
                  %v385 = vld [vmem:[%s361 + $0x40] sm:$0xff]
                  %386 = vst [vmem:[%s362 + $0x30] sm:$0xff] %v385
                  %v387 = vld [vmem:[%s361 + $0x48] sm:$0xff]
                  %388 = vst [vmem:[%s362 + $0x38] sm:$0xff] %v387
                  %v389 = vld [vmem:[%s361 + $0x50] sm:$0xff]
                  %390 = vst [vmem:[%s362 + $0x40] sm:$0xff] %v389
                  %v391 = vld [vmem:[%s361 + $0x58] sm:$0xff]
                  %392 = vst [vmem:[%s362 + $0x48] sm:$0xff] %v391
                  %v393 = vld [vmem:[%s361 + $0x60] sm:$0xff]
                  %394 = vst [vmem:[%s362 + $0x50] sm:$0xff] %v393
                  %v395 = vld [vmem:[%s361 + $0x50] sm:$0xff]
                  %396 = vst [vmem:[%s362 + $0x30] sm:$0xff] %v395
                  %v397 = vld [vmem:[%s361 + $0x58] sm:$0xff]
                  %398 = vst [vmem:[%s362 + $0x38] sm:$0xff] %v397
                  %v399 = vld [vmem:[%s361 + $0x60] sm:$0xff]
                  %400 = vst [vmem:[%s362 + $0x40] sm:$0xff] %v399
                  %v401 = vld [vmem:[%s361 + $0x68] sm:$0xff]
                  %402 = vst [vmem:[%s362 + $0x48] sm:$0xff] %v401
                  %v403 = vld [vmem:[%s361 + $0x70] sm:$0xff]
                  %404 = vst [vmem:[%s362 + $0x50] sm:$0xff] %v403
                  %v405 = vld [vmem:[%s361 + $0x78] sm:$0xff]
                  %406 = vst [vmem:[%s362 + $0x58] sm:$0xff] %v405
                  %v407 = vld [vmem:[%s361 + $0x80] sm:$0xff]
                  %408 = vst [vmem:[%s362 + $0x60] sm:$0xff] %v407
                  %v409 = vld [vmem:[%s361 + $0x88] sm:$0xff]
                  %410 = vst [vmem:[%s362 + $0x68] sm:$0xff] %v409
                  %v411 = vld [vmem:[%s361 + $0x78] sm:$0xff]
                  %412 = vst [vmem:[%s362 + $0x48] sm:$0xff] %v411
                  %v413 = vld [vmem:[%s361 + $0x80] sm:$0xff]
                  %414 = vst [vmem:[%s362 + $0x50] sm:$0xff] %v413
                  %v415 = vld [vmem:[%s361 + $0x88] sm:$0xff]
                  %416 = vst [vmem:[%s362 + $0x58] sm:$0xff] %v415
                  %v417 = vld [vmem:[%s361 + $0x90] sm:$0xff]
                  %418 = vst [vmem:[%s362 + $0x60] sm:$0xff] %v417
                  %v419 = vld [vmem:[%s361 + $0x98] sm:$0xff]
                  %420 = vst [vmem:[%s362 + $0x68] sm:$0xff] %v419
                  %v421 = vld [vmem:[%s361 + $0xa0] sm:$0xff]
                  %422 = vst [vmem:[%s362 + $0x70] sm:$0xff] %v421
                  %v423 = vld [vmem:[%s361 + $0xa8] sm:$0xff]
                  %424 = vst [vmem:[%s362 + $0x78] sm:$0xff] %v423
                  %v425 = vld [vmem:[%s361 + $0xb0] sm:$0xff]
                  %426 = vst [vmem:[%s362 + $0x80] sm:$0xff] %v425
                  %s427 = sadd.s32 1, %s360
                  %p428 = scmp.ge.s32.totalorder %s427, %s353
                  %s429 = scalar_select %p428, 0, %s427
                  %s430 = smul.u32 %s429, 64
                  %s431 = smul.u32 %s429, 64
                  %s432 = scalar_lea.vmem %s196, %s430
                  %s433 = scalar_lea.vmem %s188, %s431 [#allocation3]
                $region82: #{qnetwork_forward.1} parent=76 // loop_footer
                  %s357 = sadd.s32 %s355, 1
                $region83: #{qnetwork_forward.1} parent=76 // loop_footer_branch
                  %354 = sbr.rel target = $region79
                $region84: #{qnetwork_forward.1} parent=76 // loop_exit
                  _
                %s434 = sshrl.u32 %s352, 3
                %s435 = sand.u32 %s352, 7
                %s436 = smul.u32 %s434, 8
                %s437 = smul.u32 8, %s436
                %s438 = scalar_lea.vmem %s196, %s437
                %s439 = smul.u32 8, %s436
                %s440 = scalar_lea.vmem %s188, %s439 [#allocation3]
                // While loop
                $region85: #{qnetwork_forward.1} parent=76 // loop_pre_header
                  _
                $region86: #{qnetwork_forward.1} parent=76 // loop_header
                  %s442 = sphi 0, %s444
                  %p443 = scmp.ge.s32.totalorder %s442, %s435
                  %s447 = sphi 0, %s460
                  %s448 = sphi %s438, %s463
                  %s449 = sphi %s440, %s464
                $region87: #{qnetwork_forward.1} parent=76 // loop_header_branch
                  %446 = sbr.rel (%p443) target = $region91
                $region88: #{qnetwork_forward.1} parent=76 // loop_body
                  %v450 = vld [vmem:[%s448] sm:$0xff]
                  %451 = vst [vmem:[%s449] sm:$0xff] %v450
                  %v452 = vld [vmem:[%s448 + $0x28] sm:$0xff]
                  %453 = vst [vmem:[%s449 + $0x18] sm:$0xff] %v452
                  %v454 = vld [vmem:[%s448 + $0x50] sm:$0xff]
                  %455 = vst [vmem:[%s449 + $0x30] sm:$0xff] %v454
                  %v456 = vld [vmem:[%s448 + $0x78] sm:$0xff]
                  %457 = vst [vmem:[%s449 + $0x48] sm:$0xff] %v456
                  %s458 = sadd.s32 1, %s447
                  %p459 = scmp.ge.s32.totalorder %s458, %s435
                  %s460 = scalar_select %p459, 0, %s458
                  %s461 = smul.u32 %s460, 8
                  %s462 = smul.u32 %s460, 8
                  %s463 = scalar_lea.vmem %s438, %s461
                  %s464 = scalar_lea.vmem %s440, %s462 [#allocation3]
                $region89: #{qnetwork_forward.1} parent=76 // loop_footer
                  %s444 = sadd.s32 %s442, 1
                $region90: #{qnetwork_forward.1} parent=76 // loop_footer_branch
                  %441 = sbr.rel target = $region86
                $region91: #{qnetwork_forward.1} parent=76 // loop_exit
                  _
                %s465 = sshll.u32 1, %s347
                %s466 = ssub.s32 %s465, 1
                loop: start=0, step=1, limit=1
                $region92: #{qnetwork_forward.1} parent=76 // loop_pre_header
                  _
                $region93: #{qnetwork_forward.1} parent=76 // loop_header
                  %s468 = sphi 0, %s472
                  %p469 = scmp.ge.s32.totalorder %s468, 1
                  %s473 = sphi %s349, %s349
                  %s474 = sphi %s351, %s351
                $region94: #{qnetwork_forward.1} parent=76 // loop_header_branch
                  %471 = sbr.rel (%p469) target = $region98
                $region95: #{qnetwork_forward.1} parent=76 // loop_body
                  %v475 = vld [vmem:[%s473] sm:%s466]
                  %476 = vst [vmem:[%s474] sm:%s466] %v475
                  %v477 = vld [vmem:[%s473 + $0x28] sm:%s466]
                  %478 = vst [vmem:[%s474 + $0x18] sm:%s466] %v477
                  %v479 = vld [vmem:[%s473 + $0x50] sm:%s466]
                  %480 = vst [vmem:[%s474 + $0x30] sm:%s466] %v479
                  %v481 = vld [vmem:[%s473 + $0x78] sm:%s466]
                  %482 = vst [vmem:[%s474 + $0x48] sm:%s466] %v481
                $region96: #{qnetwork_forward.1} parent=76 // loop_footer
                  %s472 = sadd.s32 1, %s468
                $region97: #{qnetwork_forward.1} parent=76 // loop_footer_branch
                  %467 = sbr.rel target = $region93
                $region98: #{qnetwork_forward.1} parent=76 // loop_exit
                  _
              $region77: #{qnetwork_forward.1} parent=43 // pred_fallthru
                _
            $region44: #{qnetwork_forward.1} parent=39 // pred_fallthru
              _
            // Predicated region
            $region45: #{qnetwork_forward.1} parent=39 // pred_check
              %p205 = pneg %p201
            $region46: #{qnetwork_forward.1} parent=39 // pred_check_branch
              %207 = sbr.rel (%p205) target = $region48
            $region47: #{qnetwork_forward.1} parent=39 // pred_region
              %s208 = sshll.u32 1, %s197
              %s209 = ssub.s32 %s208, 1
              loop: start=0, step=1, limit=1
              $region49: #{qnetwork_forward.1} parent=47 // loop_pre_header
                _
              $region50: #{qnetwork_forward.1} parent=47 // loop_header
                %s211 = sphi 0, %s215
                %p212 = scmp.ge.s32.totalorder %s211, 1
                %s216 = sphi %s196, %s196
                %s217 = sphi %s188, %s188
              $region51: #{qnetwork_forward.1} parent=47 // loop_header_branch
                %214 = sbr.rel (%p212) target = $region55
              $region52: #{qnetwork_forward.1} parent=47 // loop_body
                %v218 = vld [vmem:[%s216] sm:%s209]
                %219 = vst [vmem:[%s217] sm:%s209] %v218
                %v220 = vld [vmem:[%s216 + $0x28] sm:%s209]
                %221 = vst [vmem:[%s217 + $0x18] sm:%s209] %v220
                %v222 = vld [vmem:[%s216 + $0x50] sm:%s209]
                %223 = vst [vmem:[%s217 + $0x30] sm:%s209] %v222
                %v224 = vld [vmem:[%s216 + $0x78] sm:%s209]
                %225 = vst [vmem:[%s217 + $0x48] sm:%s209] %v224
              $region53: #{qnetwork_forward.1} parent=47 // loop_footer
                %s215 = sadd.s32 1, %s211
              $region54: #{qnetwork_forward.1} parent=47 // loop_footer_branch
                %210 = sbr.rel target = $region50
              $region55: #{qnetwork_forward.1} parent=47 // loop_exit
                _
            $region48: #{qnetwork_forward.1} parent=39 // pred_fallthru
              _
          $region40: #{qnetwork_forward.1} parent=35 // pred_fallthru
            _
          %483 = vnop
        $region36: #{qnetwork_forward.1} parent=31 // pred_fallthru
          _
      $region32: #{qnetwork_forward.1} parent=5 // pred_fallthru
        _
      %p484 = scmp.le.s32.totalorder 1, %s15
      %p485 = scmp.lt.s32.totalorder %s15, 3
      %p486 = pnand %p484, %p485
      %p487 = pneg %p486
      // Predicated region
      $region99: #{qnetwork_forward.1} parent=5 // pred_check
        _
      $region100: #{qnetwork_forward.1} parent=5 // pred_check_branch
        %489 = sbr.rel (%p486) target = $region102
      $region101: #{qnetwork_forward.1} parent=5 // pred_region
        %s490 = ssub.s32 %s15, 1
        %s491 = sand.u32 %s28, 1
        %s492 = sand.u32 %s28, 1
        %s493 = smul.addr %s492, 96
        %s494 = scalar_lea.vmem [#allocation3], %s493
        // Predicated region
        $region103: #{qnetwork_forward.1} parent=101 // pred_check
          %p495 = pneg %p41
        $region104: #{qnetwork_forward.1} parent=101 // pred_check_branch
          %497 = sbr.rel (%p495) target = $region106
        $region105: #{qnetwork_forward.1} parent=101 // pred_region
          _
        $region106: #{qnetwork_forward.1} parent=101 // pred_fallthru
          _
        %s498 = sand.u32 %s28, 1
        %s499 = sand.u32 %s28, 1
        %s500 = smul.addr %s499, 96
        %s501 = scalar_lea.vmem [#allocation3], %s500
        %p502 = pneg %p41
        %p503 = pneg %p38
        %p504 = pneg %p62
        %p505 = pneg %p59
        %p506 = pneg %p83
        %p507 = pneg %p80
        %p508 = pneg %p104
        %p509 = pneg %p101
        %p510 = pneg %p125
        %p511 = pneg %p122
        %p512 = pneg %p151
        %p513 = pneg %p148
        %s514 = sand.u32 %s138, 1
        %s515 = scalar_lea.sflag [#allocation5], %s514
        %s516 = sand.u32 %s138, 1
        %s517 = smul.addr %s516, 3
        %s518 = scalar_lea.vmem [#allocation4], %s517
        %s519 = smul.u32 3, %s20
        %s520 = ssub.s32 5, %s519
        %p521 = scmp.lt.s32.totalorder %s520, 3
        %s522 = scalar_select %p521, %s520, 3
        %s523 = smul.u32 32, %s522
        %s524 = smul.u32 3, %s20
        %s525 = ssub.s32 5, %s524
        %p526 = scmp.lt.s32.totalorder %s525, 3
        %s527 = scalar_select %p526, %s525, 3
        %v529 = vld [vmem:[%s3] sm:$0xff]
        %v530 = vld [vmem:[%s3 + $0x8] sm:$0xff]
        %v531 = vld [vmem:[%s3 + $0x10] sm:$0xff]
        %v532 = vld [vmem:[%s3 + $0x18] sm:$0xff]
        %v533 = vld [vmem:[%s3 + $0x20] sm:$0xff]
        %v534 = vld [vmem:[%s3 + $0x28] sm:$0xff]
        %v535 = vld [vmem:[%s3 + $0x30] sm:$0xff]
        %v536 = vld [vmem:[%s3 + $0x38] sm:$0xff]
        %v537 = vld [vmem:[%s3 + $0x40] sm:$0xff]
        %v538 = vld [vmem:[%s3 + $0x48] sm:$0xff]
        %v539 = vld [vmem:[%s3 + $0x50] sm:$0xff]
        %v540 = vld [vmem:[%s3 + $0x58] sm:$0xff]
        %v541 = vld [vmem:[%s3 + $0x60] sm:$0xff]
        %v542 = vld [vmem:[%s3 + $0x68] sm:$0xff]
        %v543 = vld [vmem:[%s3 + $0x70] sm:$0xff]
        %v544 = vld [vmem:[%s3 + $0x78] sm:$0xff]
        %v545 = vld [vmem:[%s3 + $0x80] sm:$0xff]
        %v546 = vld [vmem:[%s3 + $0x88] sm:$0xff]
        %v547 = vld [vmem:[%s3 + $0x90] sm:$0xff]
        %v548 = vld [vmem:[%s3 + $0x98] sm:$0xff]
        %v549 = vld [vmem:[%s3 + $0xa0] sm:$0xff]
        %v550 = vld [vmem:[%s3 + $0xa8] sm:$0xff]
        %v551 = vld [vmem:[%s3 + $0xb0] sm:$0xff]
        %v552 = vld [vmem:[%s3 + $0xb8] sm:$0xff]
        %v553 = vld [vmem:[%s3 + $0xc0] sm:$0xff]
        %v554 = vld [vmem:[%s3 + $0xc8] sm:$0xff]
        %v555 = vld [vmem:[%s3 + $0xd0] sm:$0xff]
        %v556 = vld [vmem:[%s3 + $0xd8] sm:$0xff]
        %v557 = vld [vmem:[%s3 + $0xe0] sm:$0xff]
        %v558 = vld [vmem:[%s3 + $0xe8] sm:$0xff]
        %v559 = vld [vmem:[%s3 + $0xf0] sm:$0xff]
        %v560 = vld [vmem:[%s3 + $0xf8] sm:$0xff]
        %s561 = scalar_lea.vmem %s3, 256
        %v562 = vld [vmem:[%s561] sm:$0xff]
        %v563 = vld [vmem:[%s561 + $0x8] sm:$0xff]
        %v564 = vld [vmem:[%s561 + $0x10] sm:$0xff]
        %v565 = vld [vmem:[%s561 + $0x18] sm:$0xff]
        %v566 = vld [vmem:[%s561 + $0x20] sm:$0xff]
        %v567 = vld [vmem:[%s561 + $0x28] sm:$0xff]
        %v568 = vld [vmem:[%s561 + $0x30] sm:$0xff]
        %v569 = vld [vmem:[%s561 + $0x38] sm:$0xff]
        %v570 = vld [vmem:[%s561 + $0x40] sm:$0xff]
        %v571 = vld [vmem:[%s561 + $0x48] sm:$0xff]
        %v572 = vld [vmem:[%s561 + $0x50] sm:$0xff]
        %v573 = vld [vmem:[%s561 + $0x58] sm:$0xff]
        %v574 = vld [vmem:[%s561 + $0x60] sm:$0xff]
        %v575 = vld [vmem:[%s561 + $0x68] sm:$0xff]
        %v576 = vld [vmem:[%s561 + $0x70] sm:$0xff]
        %v577 = vld [vmem:[%s561 + $0x78] sm:$0xff]
        %v578 = vld [vmem:[%s561 + $0x80] sm:$0xff]
        %v579 = vld [vmem:[%s561 + $0x88] sm:$0xff]
        %v580 = vld [vmem:[%s561 + $0x90] sm:$0xff]
        %v581 = vld [vmem:[%s561 + $0x98] sm:$0xff]
        %v582 = vld [vmem:[%s561 + $0xa0] sm:$0xff]
        %v583 = vld [vmem:[%s561 + $0xa8] sm:$0xff]
        %v584 = vld [vmem:[%s561 + $0xb0] sm:$0xff]
        %v585 = vld [vmem:[%s561 + $0xb8] sm:$0xff]
        %v586 = vld [vmem:[%s561 + $0xc0] sm:$0xff]
        %v587 = vld [vmem:[%s561 + $0xc8] sm:$0xff]
        %v588 = vld [vmem:[%s561 + $0xd0] sm:$0xff]
        %v589 = vld [vmem:[%s561 + $0xd8] sm:$0xff]
        %v590 = vld [vmem:[%s561 + $0xe0] sm:$0xff]
        %v591 = vld [vmem:[%s561 + $0xe8] sm:$0xff]
        %v592 = vld [vmem:[%s561 + $0xf0] sm:$0xff]
        %v593 = vld [vmem:[%s561 + $0xf8] sm:$0xff]
        %s594 = scalar_lea.vmem %s3, 512
        %v595 = vld [vmem:[%s594] sm:$0xff]
        %v596 = vld [vmem:[%s594 + $0x8] sm:$0xff]
        %v597 = vld [vmem:[%s594 + $0x10] sm:$0xff]
        %v598 = vld [vmem:[%s594 + $0x18] sm:$0xff]
        %v599 = vld [vmem:[%s594 + $0x20] sm:$0xff]
        %v600 = vld [vmem:[%s594 + $0x28] sm:$0xff]
        %v601 = vld [vmem:[%s594 + $0x30] sm:$0xff]
        %v602 = vld [vmem:[%s594 + $0x38] sm:$0xff]
        %v603 = vld [vmem:[%s594 + $0x40] sm:$0xff]
        %v604 = vld [vmem:[%s594 + $0x48] sm:$0xff]
        %v605 = vld [vmem:[%s594 + $0x50] sm:$0xff]
        %v606 = vld [vmem:[%s594 + $0x58] sm:$0xff]
        %v607 = vld [vmem:[%s594 + $0x60] sm:$0xff]
        %v608 = vld [vmem:[%s594 + $0x68] sm:$0xff]
        %v609 = vld [vmem:[%s594 + $0x70] sm:$0xff]
        %v610 = vld [vmem:[%s594 + $0x78] sm:$0xff]
        %v611 = vld [vmem:[%s594 + $0x80] sm:$0xff]
        %v612 = vld [vmem:[%s594 + $0x88] sm:$0xff]
        %v613 = vld [vmem:[%s594 + $0x90] sm:$0xff]
        %v614 = vld [vmem:[%s594 + $0x98] sm:$0xff]
        %v615 = vld [vmem:[%s594 + $0xa0] sm:$0xff]
        %v616 = vld [vmem:[%s594 + $0xa8] sm:$0xff]
        %v617 = vld [vmem:[%s594 + $0xb0] sm:$0xff]
        %v618 = vld [vmem:[%s594 + $0xb8] sm:$0xff]
        %v619 = vld [vmem:[%s594 + $0xc0] sm:$0xff]
        %v620 = vld [vmem:[%s594 + $0xc8] sm:$0xff]
        %v621 = vld [vmem:[%s594 + $0xd0] sm:$0xff]
        %v622 = vld [vmem:[%s594 + $0xd8] sm:$0xff]
        %v623 = vld [vmem:[%s594 + $0xe0] sm:$0xff]
        %v624 = vld [vmem:[%s594 + $0xe8] sm:$0xff]
        %v625 = vld [vmem:[%s594 + $0xf0] sm:$0xff]
        %v626 = vld [vmem:[%s594 + $0xf8] sm:$0xff]
        %v627 = vld [vmem:[%s494] sm:$0xff]
        %v628 = vld [vmem:[%s494 + $0x8] sm:$0xff]
        %v629 = vld [vmem:[%s494 + $0x10] sm:$0xff]
        %v630 = vld [vmem:[%s494 + $0x18] sm:$0xff]
        %v631 = vld [vmem:[%s494 + $0x20] sm:$0xff]
        %v632 = vld [vmem:[%s494 + $0x28] sm:$0xff]
        %v633 = vld [vmem:[%s494 + $0x30] sm:$0xff]
        %v634 = vld [vmem:[%s494 + $0x38] sm:$0xff]
        %v635 = vld [vmem:[%s494 + $0x40] sm:$0xff]
        %v636 = vld [vmem:[%s494 + $0x48] sm:$0xff]
        %v637 = vld [vmem:[%s494 + $0x50] sm:$0xff]
        %v638 = vld [vmem:[%s494 + $0x58] sm:$0xff]
        %v639 = vpack.c.bf16 %v630, %v627
        %v640 = vpack.c.bf16 %v631, %v628
        %v641 = vpack.c.bf16 %v632, %v629
        %v642 = vpack.c.bf16 %v636, %v633
        %v643 = vpack.c.bf16 %v637, %v634
        %v644 = vpack.c.bf16 %v638, %v635
        %v645 = vld [vmem:[%s1] sm:$0xf]
        %v646 = vld [vmem:[%s1 + $0x4] sm:$0xf]
        %v647 = vld [vmem:[%s1 + $0x8] sm:$0xf]
        %v648 = vld [vmem:[%s1 + $0xc] sm:$0xf]
        %v649 = vld [vmem:[%s1 + $0x10] sm:$0xf]
        %v650 = vld [vmem:[%s1 + $0x14] sm:$0xf]
        %v651 = vld [vmem:[%s1 + $0x18] sm:$0xf]
        %v652 = vld [vmem:[%s1 + $0x1c] sm:$0xf]
        %v653 = vld [vmem:[%s1 + $0x20] sm:$0xf]
        %v654 = vld [vmem:[%s1 + $0x24] sm:$0xf]
        %v655 = vld [vmem:[%s1 + $0x28] sm:$0xf]
        %v656 = vld [vmem:[%s1 + $0x2c] sm:$0xf]
        %v657 = vld [vmem:[%s1 + $0x30] sm:$0xf]
        %v658 = vld [vmem:[%s1 + $0x34] sm:$0xf]
        %v659 = vld [vmem:[%s1 + $0x38] sm:$0xf]
        %v660 = vld [vmem:[%s1 + $0x3c] sm:$0xf]
        %v661 = vld [vmem:[%s1 + $0x40] sm:$0xf]
        %v662 = vld [vmem:[%s1 + $0x44] sm:$0xf]
        %v663 = vld [vmem:[%s1 + $0x48] sm:$0xf]
        %v664 = vld [vmem:[%s1 + $0x4c] sm:$0xf]
        %v665 = vld [vmem:[%s1 + $0x50] sm:$0xf]
        %v666 = vld [vmem:[%s1 + $0x54] sm:$0xf]
        %v667 = vld [vmem:[%s1 + $0x58] sm:$0xf]
        %v668 = vld [vmem:[%s1 + $0x5c] sm:$0xf]
        %v669 = vld [vmem:[%s1 + $0x60] sm:$0xf]
        %v670 = vld [vmem:[%s1 + $0x64] sm:$0xf]
        %v671 = vld [vmem:[%s1 + $0x68] sm:$0xf]
        %v672 = vld [vmem:[%s1 + $0x6c] sm:$0xf]
        %v673 = vld [vmem:[%s1 + $0x70] sm:$0xf]
        %v674 = vld [vmem:[%s1 + $0x74] sm:$0xf]
        %v675 = vld [vmem:[%s1 + $0x78] sm:$0xf]
        %v676 = vld [vmem:[%s1 + $0x7c] sm:$0xf]
        %678 = vset.pattern.permute.xlu0 0
        %679 = vperm.xlu0 %678, %v529
        %v680 = vpop.permute.xlu0 %679
        %683 = vset.pattern.permute.xlu0 0
        %684 = vperm.xlu0 %683, %v530
        %v685 = vpop.permute.xlu0 %684
        %688 = vset.pattern.permute.xlu0 0
        %689 = vperm.xlu0 %688, %v531
        %v690 = vpop.permute.xlu0 %689
        %693 = vset.pattern.permute.xlu0 0
        %694 = vperm.xlu0 %693, %v532
        %v695 = vpop.permute.xlu0 %694
        %698 = vset.pattern.permute.xlu0 0
        %699 = vperm.xlu0 %698, %v533
        %v700 = vpop.permute.xlu0 %699
        %703 = vset.pattern.permute.xlu0 0
        %704 = vperm.xlu0 %703, %v534
        %v705 = vpop.permute.xlu0 %704
        %708 = vset.pattern.permute.xlu0 0
        %709 = vperm.xlu0 %708, %v535
        %v710 = vpop.permute.xlu0 %709
        %713 = vset.pattern.permute.xlu0 0
        %714 = vperm.xlu0 %713, %v536
        %v715 = vpop.permute.xlu0 %714
        %718 = vset.pattern.permute.xlu0 0
        %719 = vperm.xlu0 %718, %v537
        %v720 = vpop.permute.xlu0 %719
        %723 = vset.pattern.permute.xlu0 0
        %724 = vperm.xlu0 %723, %v538
        %v725 = vpop.permute.xlu0 %724
        %728 = vset.pattern.permute.xlu0 0
        %729 = vperm.xlu0 %728, %v539
        %v730 = vpop.permute.xlu0 %729
        %733 = vset.pattern.permute.xlu0 0
        %734 = vperm.xlu0 %733, %v540
        %v735 = vpop.permute.xlu0 %734
        %738 = vset.pattern.permute.xlu0 0
        %739 = vperm.xlu0 %738, %v541
        %v740 = vpop.permute.xlu0 %739
        %743 = vset.pattern.permute.xlu0 0
        %744 = vperm.xlu0 %743, %v542
        %v745 = vpop.permute.xlu0 %744
        %748 = vset.pattern.permute.xlu0 0
        %749 = vperm.xlu0 %748, %v543
        %v750 = vpop.permute.xlu0 %749
        %753 = vset.pattern.permute.xlu0 0
        %754 = vperm.xlu0 %753, %v544
        %v755 = vpop.permute.xlu0 %754
        %758 = vset.pattern.permute.xlu0 0
        %759 = vperm.xlu0 %758, %v545
        %v760 = vpop.permute.xlu0 %759
        %763 = vset.pattern.permute.xlu0 0
        %764 = vperm.xlu0 %763, %v546
        %v765 = vpop.permute.xlu0 %764
        %768 = vset.pattern.permute.xlu0 0
        %769 = vperm.xlu0 %768, %v547
        %v770 = vpop.permute.xlu0 %769
        %773 = vset.pattern.permute.xlu0 0
        %774 = vperm.xlu0 %773, %v548
        %v775 = vpop.permute.xlu0 %774
        %778 = vset.pattern.permute.xlu0 0
        %779 = vperm.xlu0 %778, %v549
        %v780 = vpop.permute.xlu0 %779
        %783 = vset.pattern.permute.xlu0 0
        %784 = vperm.xlu0 %783, %v550
        %v785 = vpop.permute.xlu0 %784
        %788 = vset.pattern.permute.xlu0 0
        %789 = vperm.xlu0 %788, %v551
        %v790 = vpop.permute.xlu0 %789
        %793 = vset.pattern.permute.xlu0 0
        %794 = vperm.xlu0 %793, %v552
        %v795 = vpop.permute.xlu0 %794
        %798 = vset.pattern.permute.xlu0 0
        %799 = vperm.xlu0 %798, %v553
        %v800 = vpop.permute.xlu0 %799
        %803 = vset.pattern.permute.xlu0 0
        %804 = vperm.xlu0 %803, %v554
        %v805 = vpop.permute.xlu0 %804
        %808 = vset.pattern.permute.xlu0 0
        %809 = vperm.xlu0 %808, %v555
        %v810 = vpop.permute.xlu0 %809
        %813 = vset.pattern.permute.xlu0 0
        %814 = vperm.xlu0 %813, %v556
        %v815 = vpop.permute.xlu0 %814
        %818 = vset.pattern.permute.xlu0 0
        %819 = vperm.xlu0 %818, %v557
        %v820 = vpop.permute.xlu0 %819
        %823 = vset.pattern.permute.xlu0 0
        %824 = vperm.xlu0 %823, %v558
        %v825 = vpop.permute.xlu0 %824
        %828 = vset.pattern.permute.xlu0 0
        %829 = vperm.xlu0 %828, %v559
        %v830 = vpop.permute.xlu0 %829
        %833 = vset.pattern.permute.xlu0 0
        %834 = vperm.xlu0 %833, %v560
        %v835 = vpop.permute.xlu0 %834
        %v869 = vunpack.c.l.b16 %v645
        %v870 = vunpack.c.l.b16 %v646
        %v871 = vunpack.c.l.b16 %v647
        %v872 = vunpack.c.l.b16 %v648
        %v873 = vunpack.c.l.b16 %v649
        %v874 = vunpack.c.l.b16 %v650
        %v875 = vunpack.c.l.b16 %v651
        %v876 = vunpack.c.l.b16 %v652
        %v877 = vunpack.c.l.b16 %v653
        %v878 = vunpack.c.l.b16 %v654
        %v879 = vunpack.c.l.b16 %v655
        %v880 = vunpack.c.l.b16 %v656
        %v881 = vunpack.c.l.b16 %v657
        %v882 = vunpack.c.l.b16 %v658
        %v883 = vunpack.c.l.b16 %v659
        %v884 = vunpack.c.l.b16 %v660
        %v885 = vunpack.c.l.b16 %v661
        %v886 = vunpack.c.l.b16 %v662
        %v887 = vunpack.c.l.b16 %v663
        %v888 = vunpack.c.l.b16 %v664
        %v889 = vunpack.c.l.b16 %v665
        %v890 = vunpack.c.l.b16 %v666
        %v891 = vunpack.c.l.b16 %v667
        %v892 = vunpack.c.l.b16 %v668
        %v893 = vunpack.c.l.b16 %v669
        %v894 = vunpack.c.l.b16 %v670
        %v895 = vunpack.c.l.b16 %v671
        %v896 = vunpack.c.l.b16 %v672
        %v897 = vunpack.c.l.b16 %v673
        %v898 = vunpack.c.l.b16 %v674
        %v899 = vunpack.c.l.b16 %v675
        %v900 = vunpack.c.l.b16 %v676
        %v901 = vpack.c.b16 %v870, %v869
        %v902 = vpack.c.b16 %v872, %v871
        %v903 = vpack.c.b16 %v874, %v873
        %v904 = vpack.c.b16 %v876, %v875
        %v905 = vpack.c.b16 %v878, %v877
        %v906 = vpack.c.b16 %v880, %v879
        %v907 = vpack.c.b16 %v882, %v881
        %v908 = vpack.c.b16 %v884, %v883
        %v909 = vpack.c.b16 %v886, %v885
        %v910 = vpack.c.b16 %v888, %v887
        %v911 = vpack.c.b16 %v890, %v889
        %v912 = vpack.c.b16 %v892, %v891
        %v913 = vpack.c.b16 %v894, %v893
        %v914 = vpack.c.b16 %v896, %v895
        %v915 = vpack.c.b16 %v898, %v897
        %v916 = vpack.c.b16 %v900, %v899
        %vm917 = vcmask 261120
        %v919 = vsel %vm917, %v901, 0
        %v922 = vsel %vm917, %v902, 0
        %v925 = vsel %vm917, %v903, 0
        %v928 = vsel %vm917, %v904, 0
        %v931 = vsel %vm917, %v905, 0
        %v934 = vsel %vm917, %v906, 0
        %v937 = vsel %vm917, %v907, 0
        %v940 = vsel %vm917, %v908, 0
        %v943 = vsel %vm917, %v909, 0
        %v946 = vsel %vm917, %v910, 0
        %v949 = vsel %vm917, %v911, 0
        %v952 = vsel %vm917, %v912, 0
        %v955 = vsel %vm917, %v913, 0
        %v958 = vsel %vm917, %v914, 0
        %v961 = vsel %vm917, %v915, 0
        %v964 = vsel %vm917, %v916, 0
        %966 = vmatpush.bf16.msra.mxu0 0
        %967 = vmatpush.bf16.msra.mxu0 0
        %968 = vmatpush.bf16.msra.mxu0 0
        %969 = vmatpush.bf16.msra.mxu0 0
        %970 = vmatpush.bf16.msra.mxu0 0
        %971 = vmatpush.bf16.msra.mxu0 0
        %972 = vmatpush.bf16.msra.mxu0 %v642
        %973 = vmatpush.bf16.msra.mxu0 %v639
        %974 = vmatmul.bf16.gmra.mxu0 %v919
        %v975 = vpop.f32.mrf.mxu0
        %v976 = vadd.f32 %v680, %v975
        %v977 = vpop.f32.mrf.mxu0
        %v978 = vadd.f32 %v685, %v977
        %979 = vmatmul.bf16.gmra.mxu0 %v922
        %v980 = vpop.f32.mrf.mxu0
        %v981 = vadd.f32 %v690, %v980
        %v982 = vpop.f32.mrf.mxu0
        %v983 = vadd.f32 %v695, %v982
        %984 = vmatmul.bf16.gmra.mxu0 %v925
        %v985 = vpop.f32.mrf.mxu0
        %v986 = vadd.f32 %v700, %v985
        %v987 = vpop.f32.mrf.mxu0
        %v988 = vadd.f32 %v705, %v987
        %989 = vmatmul.bf16.gmra.mxu0 %v928
        %v990 = vpop.f32.mrf.mxu0
        %v991 = vadd.f32 %v710, %v990
        %v992 = vpop.f32.mrf.mxu0
        %v993 = vadd.f32 %v715, %v992
        %994 = vmatmul.bf16.gmra.mxu0 %v931
        %v995 = vpop.f32.mrf.mxu0
        %v996 = vadd.f32 %v720, %v995
        %v997 = vpop.f32.mrf.mxu0
        %v998 = vadd.f32 %v725, %v997
        %999 = vmatmul.bf16.gmra.mxu0 %v934
        %v1000 = vpop.f32.mrf.mxu0
        %v1001 = vadd.f32 %v730, %v1000
        %v1002 = vpop.f32.mrf.mxu0
        %v1003 = vadd.f32 %v735, %v1002
        %1004 = vmatmul.bf16.gmra.mxu0 %v937
        %v1005 = vpop.f32.mrf.mxu0
        %v1006 = vadd.f32 %v740, %v1005
        %v1007 = vpop.f32.mrf.mxu0
        %v1008 = vadd.f32 %v745, %v1007
        %1009 = vmatmul.bf16.gmra.mxu0 %v940
        %v1010 = vpop.f32.mrf.mxu0
        %v1011 = vadd.f32 %v750, %v1010
        %v1012 = vpop.f32.mrf.mxu0
        %v1013 = vadd.f32 %v755, %v1012
        %1014 = vmatmul.bf16.gmra.mxu0 %v943
        %v1015 = vpop.f32.mrf.mxu0
        %v1016 = vadd.f32 %v760, %v1015
        %v1017 = vpop.f32.mrf.mxu0
        %v1018 = vadd.f32 %v765, %v1017
        %1019 = vmatmul.bf16.gmra.mxu0 %v946
        %v1020 = vpop.f32.mrf.mxu0
        %v1021 = vadd.f32 %v770, %v1020
        %v1022 = vpop.f32.mrf.mxu0
        %v1023 = vadd.f32 %v775, %v1022
        %1024 = vmatmul.bf16.gmra.mxu0 %v949
        %v1025 = vpop.f32.mrf.mxu0
        %v1026 = vadd.f32 %v780, %v1025
        %v1027 = vpop.f32.mrf.mxu0
        %v1028 = vadd.f32 %v785, %v1027
        %1029 = vmatmul.bf16.gmra.mxu0 %v952
        %v1030 = vpop.f32.mrf.mxu0
        %v1031 = vadd.f32 %v790, %v1030
        %v1032 = vpop.f32.mrf.mxu0
        %v1033 = vadd.f32 %v795, %v1032
        %1034 = vmatmul.bf16.gmra.mxu0 %v955
        %v1035 = vpop.f32.mrf.mxu0
        %v1036 = vadd.f32 %v800, %v1035
        %v1037 = vpop.f32.mrf.mxu0
        %v1038 = vadd.f32 %v805, %v1037
        %1039 = vmatmul.bf16.gmra.mxu0 %v958
        %v1040 = vpop.f32.mrf.mxu0
        %v1041 = vadd.f32 %v810, %v1040
        %v1042 = vpop.f32.mrf.mxu0
        %v1043 = vadd.f32 %v815, %v1042
        %1044 = vmatmul.bf16.gmra.mxu0 %v961
        %v1045 = vpop.f32.mrf.mxu0
        %v1046 = vadd.f32 %v820, %v1045
        %v1047 = vpop.f32.mrf.mxu0
        %v1048 = vadd.f32 %v825, %v1047
        %1049 = vmatmul.bf16.gmra.mxu0 %v964
        %v1050 = vpop.f32.mrf.mxu0
        %v1051 = vadd.f32 %v830, %v1050
        %v1052 = vpop.f32.mrf.mxu0
        %v1053 = vadd.f32 %v835, %v1052
        %1054 = vdwg.mxu0
        %1055 = vmatpush.bf16.msra.mxu0 0
        %1056 = vmatpush.bf16.msra.mxu0 0
        %1057 = vmatpush.bf16.msra.mxu0 0
        %1058 = vmatpush.bf16.msra.mxu0 0
        %1059 = vmatpush.bf16.msra.mxu0 0
        %1060 = vmatpush.bf16.msra.mxu0 0
        %1061 = vmatpush.bf16.msra.mxu0 %v643
        %1062 = vmatpush.bf16.msra.mxu0 %v640
        %1063 = vmatmul.bf16.gmra.mxu0 %v919
        %v1064 = vpop.f32.mrf.mxu0
        %v1065 = vadd.f32 %v680, %v1064
        %v1066 = vpop.f32.mrf.mxu0
        %v1067 = vadd.f32 %v685, %v1066
        %1068 = vmatmul.bf16.gmra.mxu0 %v922
        %v1069 = vpop.f32.mrf.mxu0
        %v1070 = vadd.f32 %v690, %v1069
        %v1071 = vpop.f32.mrf.mxu0
        %v1072 = vadd.f32 %v695, %v1071
        %1073 = vmatmul.bf16.gmra.mxu0 %v925
        %v1074 = vpop.f32.mrf.mxu0
        %v1075 = vadd.f32 %v700, %v1074
        %v1076 = vpop.f32.mrf.mxu0
        %v1077 = vadd.f32 %v705, %v1076
        %1078 = vmatmul.bf16.gmra.mxu0 %v928
        %v1079 = vpop.f32.mrf.mxu0
        %v1080 = vadd.f32 %v710, %v1079
        %v1081 = vpop.f32.mrf.mxu0
        %v1082 = vadd.f32 %v715, %v1081
        %1083 = vmatmul.bf16.gmra.mxu0 %v931
        %v1084 = vpop.f32.mrf.mxu0
        %v1085 = vadd.f32 %v720, %v1084
        %v1086 = vpop.f32.mrf.mxu0
        %v1087 = vadd.f32 %v725, %v1086
        %1088 = vmatmul.bf16.gmra.mxu0 %v934
        %v1089 = vpop.f32.mrf.mxu0
        %v1090 = vadd.f32 %v730, %v1089
        %v1091 = vpop.f32.mrf.mxu0
        %v1092 = vadd.f32 %v735, %v1091
        %1093 = vmatmul.bf16.gmra.mxu0 %v937
        %v1094 = vpop.f32.mrf.mxu0
        %v1095 = vadd.f32 %v740, %v1094
        %v1096 = vpop.f32.mrf.mxu0
        %v1097 = vadd.f32 %v745, %v1096
        %1098 = vmatmul.bf16.gmra.mxu0 %v940
        %v1099 = vpop.f32.mrf.mxu0
        %v1100 = vadd.f32 %v750, %v1099
        %v1101 = vpop.f32.mrf.mxu0
        %v1102 = vadd.f32 %v755, %v1101
        %1103 = vmatmul.bf16.gmra.mxu0 %v943
        %v1104 = vpop.f32.mrf.mxu0
        %v1105 = vadd.f32 %v760, %v1104
        %v1106 = vpop.f32.mrf.mxu0
        %v1107 = vadd.f32 %v765, %v1106
        %1108 = vmatmul.bf16.gmra.mxu0 %v946
        %v1109 = vpop.f32.mrf.mxu0
        %v1110 = vadd.f32 %v770, %v1109
        %v1111 = vpop.f32.mrf.mxu0
        %v1112 = vadd.f32 %v775, %v1111
        %1113 = vmatmul.bf16.gmra.mxu0 %v949
        %v1114 = vpop.f32.mrf.mxu0
        %v1115 = vadd.f32 %v780, %v1114
        %v1116 = vpop.f32.mrf.mxu0
        %v1117 = vadd.f32 %v785, %v1116
        %1118 = vmatmul.bf16.gmra.mxu0 %v952
        %v1119 = vpop.f32.mrf.mxu0
        %v1120 = vadd.f32 %v790, %v1119
        %v1121 = vpop.f32.mrf.mxu0
        %v1122 = vadd.f32 %v795, %v1121
        %1123 = vmatmul.bf16.gmra.mxu0 %v955
        %v1124 = vpop.f32.mrf.mxu0
        %v1125 = vadd.f32 %v800, %v1124
        %v1126 = vpop.f32.mrf.mxu0
        %v1127 = vadd.f32 %v805, %v1126
        %1128 = vmatmul.bf16.gmra.mxu0 %v958
        %v1129 = vpop.f32.mrf.mxu0
        %v1130 = vadd.f32 %v810, %v1129
        %v1131 = vpop.f32.mrf.mxu0
        %v1132 = vadd.f32 %v815, %v1131
        %1133 = vmatmul.bf16.gmra.mxu0 %v961
        %v1134 = vpop.f32.mrf.mxu0
        %v1135 = vadd.f32 %v820, %v1134
        %v1136 = vpop.f32.mrf.mxu0
        %v1137 = vadd.f32 %v825, %v1136
        %1138 = vmatmul.bf16.gmra.mxu0 %v964
        %v1139 = vpop.f32.mrf.mxu0
        %v1140 = vadd.f32 %v830, %v1139
        %v1141 = vpop.f32.mrf.mxu0
        %v1142 = vadd.f32 %v835, %v1141
        %1143 = vdwg.mxu0
        %1144 = vmatpush.bf16.msra.mxu0 0
        %1145 = vmatpush.bf16.msra.mxu0 0
        %1146 = vmatpush.bf16.msra.mxu0 0
        %1147 = vmatpush.bf16.msra.mxu0 0
        %1148 = vmatpush.bf16.msra.mxu0 0
        %1149 = vmatpush.bf16.msra.mxu0 0
        %1150 = vmatpush.bf16.msra.mxu0 %v644
        %1151 = vmatpush.bf16.msra.mxu0 %v641
        %1152 = vmatmul.bf16.gmra.mxu0 %v919
        %v1153 = vpop.f32.mrf.mxu0
        %v1154 = vadd.f32 %v680, %v1153
        %v1155 = vpop.f32.mrf.mxu0
        %v1156 = vadd.f32 %v685, %v1155
        %1157 = vmatmul.bf16.gmra.mxu0 %v922
        %v1158 = vpop.f32.mrf.mxu0
        %v1159 = vadd.f32 %v690, %v1158
        %v1160 = vpop.f32.mrf.mxu0
        %v1161 = vadd.f32 %v695, %v1160
        %1162 = vmatmul.bf16.gmra.mxu0 %v925
        %v1163 = vpop.f32.mrf.mxu0
        %v1164 = vadd.f32 %v700, %v1163
        %v1165 = vpop.f32.mrf.mxu0
        %v1166 = vadd.f32 %v705, %v1165
        %1167 = vmatmul.bf16.gmra.mxu0 %v928
        %v1168 = vpop.f32.mrf.mxu0
        %v1169 = vadd.f32 %v710, %v1168
        %v1170 = vpop.f32.mrf.mxu0
        %v1171 = vadd.f32 %v715, %v1170
        %1172 = vmatmul.bf16.gmra.mxu0 %v931
        %v1173 = vpop.f32.mrf.mxu0
        %v1174 = vadd.f32 %v720, %v1173
        %v1175 = vpop.f32.mrf.mxu0
        %v1176 = vadd.f32 %v725, %v1175
        %1177 = vmatmul.bf16.gmra.mxu0 %v934
        %v1178 = vpop.f32.mrf.mxu0
        %v1179 = vadd.f32 %v730, %v1178
        %v1180 = vpop.f32.mrf.mxu0
        %v1181 = vadd.f32 %v735, %v1180
        %1182 = vmatmul.bf16.gmra.mxu0 %v937
        %v1183 = vpop.f32.mrf.mxu0
        %v1184 = vadd.f32 %v740, %v1183
        %v1185 = vpop.f32.mrf.mxu0
        %v1186 = vadd.f32 %v745, %v1185
        %1187 = vmatmul.bf16.gmra.mxu0 %v940
        %v1188 = vpop.f32.mrf.mxu0
        %v1189 = vadd.f32 %v750, %v1188
        %v1190 = vpop.f32.mrf.mxu0
        %v1191 = vadd.f32 %v755, %v1190
        %1192 = vmatmul.bf16.gmra.mxu0 %v943
        %v1193 = vpop.f32.mrf.mxu0
        %v1194 = vadd.f32 %v760, %v1193
        %v1195 = vpop.f32.mrf.mxu0
        %v1196 = vadd.f32 %v765, %v1195
        %1197 = vmatmul.bf16.gmra.mxu0 %v946
        %v1198 = vpop.f32.mrf.mxu0
        %v1199 = vadd.f32 %v770, %v1198
        %v1200 = vpop.f32.mrf.mxu0
        %v1201 = vadd.f32 %v775, %v1200
        %1202 = vmatmul.bf16.gmra.mxu0 %v949
        %v1203 = vpop.f32.mrf.mxu0
        %v1204 = vadd.f32 %v780, %v1203
        %v1205 = vpop.f32.mrf.mxu0
        %v1206 = vadd.f32 %v785, %v1205
        %1207 = vmatmul.bf16.gmra.mxu0 %v952
        %v1208 = vpop.f32.mrf.mxu0
        %v1209 = vadd.f32 %v790, %v1208
        %v1210 = vpop.f32.mrf.mxu0
        %v1211 = vadd.f32 %v795, %v1210
        %1212 = vmatmul.bf16.gmra.mxu0 %v955
        %v1213 = vpop.f32.mrf.mxu0
        %v1214 = vadd.f32 %v800, %v1213
        %v1215 = vpop.f32.mrf.mxu0
        %v1216 = vadd.f32 %v805, %v1215
        %1217 = vmatmul.bf16.gmra.mxu0 %v958
        %v1218 = vpop.f32.mrf.mxu0
        %v1219 = vadd.f32 %v810, %v1218
        %v1220 = vpop.f32.mrf.mxu0
        %v1221 = vadd.f32 %v815, %v1220
        %1222 = vmatmul.bf16.gmra.mxu0 %v961
        %v1223 = vpop.f32.mrf.mxu0
        %v1224 = vadd.f32 %v820, %v1223
        %v1225 = vpop.f32.mrf.mxu0
        %v1226 = vadd.f32 %v825, %v1225
        %1227 = vmatmul.bf16.gmra.mxu0 %v964
        %v1228 = vpop.f32.mrf.mxu0
        %v1229 = vadd.f32 %v830, %v1228
        %v1230 = vpop.f32.mrf.mxu0
        %v1231 = vadd.f32 %v835, %v1230
        %1232 = vdwg.mxu0
        %v1233 = vmax.f32 %v976, 0.0
        %v1234 = vmax.f32 %v1065, 0.0
        %v1235 = vmax.f32 %v1154, 0.0
        %v1236 = vmax.f32 %v978, 0.0
        %v1237 = vmax.f32 %v1067, 0.0
        %v1238 = vmax.f32 %v1156, 0.0
        %v1239 = vmax.f32 %v981, 0.0
        %v1240 = vmax.f32 %v1070, 0.0
        %v1241 = vmax.f32 %v1159, 0.0
        %v1242 = vmax.f32 %v983, 0.0
        %v1243 = vmax.f32 %v1072, 0.0
        %v1244 = vmax.f32 %v1161, 0.0
        %v1245 = vmax.f32 %v986, 0.0
        %v1246 = vmax.f32 %v1075, 0.0
        %v1247 = vmax.f32 %v1164, 0.0
        %v1248 = vmax.f32 %v988, 0.0
        %v1249 = vmax.f32 %v1077, 0.0
        %v1250 = vmax.f32 %v1166, 0.0
        %v1251 = vmax.f32 %v991, 0.0
        %v1252 = vmax.f32 %v1080, 0.0
        %v1253 = vmax.f32 %v1169, 0.0
        %v1254 = vmax.f32 %v993, 0.0
        %v1255 = vmax.f32 %v1082, 0.0
        %v1256 = vmax.f32 %v1171, 0.0
        %v1257 = vmax.f32 %v996, 0.0
        %v1258 = vmax.f32 %v1085, 0.0
        %v1259 = vmax.f32 %v1174, 0.0
        %v1260 = vmax.f32 %v998, 0.0
        %v1261 = vmax.f32 %v1087, 0.0
        %v1262 = vmax.f32 %v1176, 0.0
        %v1263 = vmax.f32 %v1001, 0.0
        %v1264 = vmax.f32 %v1090, 0.0
        %v1265 = vmax.f32 %v1179, 0.0
        %v1266 = vmax.f32 %v1003, 0.0
        %v1267 = vmax.f32 %v1092, 0.0
        %v1268 = vmax.f32 %v1181, 0.0
        %v1269 = vmax.f32 %v1006, 0.0
        %v1270 = vmax.f32 %v1095, 0.0
        %v1271 = vmax.f32 %v1184, 0.0
        %v1272 = vmax.f32 %v1008, 0.0
        %v1273 = vmax.f32 %v1097, 0.0
        %v1274 = vmax.f32 %v1186, 0.0
        %v1275 = vmax.f32 %v1011, 0.0
        %v1276 = vmax.f32 %v1100, 0.0
        %v1277 = vmax.f32 %v1189, 0.0
        %v1278 = vmax.f32 %v1013, 0.0
        %v1279 = vmax.f32 %v1102, 0.0
        %v1280 = vmax.f32 %v1191, 0.0
        %v1281 = vmax.f32 %v1016, 0.0
        %v1282 = vmax.f32 %v1105, 0.0
        %v1283 = vmax.f32 %v1194, 0.0
        %v1284 = vmax.f32 %v1018, 0.0
        %v1285 = vmax.f32 %v1107, 0.0
        %v1286 = vmax.f32 %v1196, 0.0
        %v1287 = vmax.f32 %v1021, 0.0
        %v1288 = vmax.f32 %v1110, 0.0
        %v1289 = vmax.f32 %v1199, 0.0
        %v1290 = vmax.f32 %v1023, 0.0
        %v1291 = vmax.f32 %v1112, 0.0
        %v1292 = vmax.f32 %v1201, 0.0
        %v1293 = vmax.f32 %v1026, 0.0
        %v1294 = vmax.f32 %v1115, 0.0
        %v1295 = vmax.f32 %v1204, 0.0
        %v1296 = vmax.f32 %v1028, 0.0
        %v1297 = vmax.f32 %v1117, 0.0
        %v1298 = vmax.f32 %v1206, 0.0
        %v1299 = vmax.f32 %v1031, 0.0
        %v1300 = vmax.f32 %v1120, 0.0
        %v1301 = vmax.f32 %v1209, 0.0
        %v1302 = vmax.f32 %v1033, 0.0
        %v1303 = vmax.f32 %v1122, 0.0
        %v1304 = vmax.f32 %v1211, 0.0
        %v1305 = vmax.f32 %v1036, 0.0
        %v1306 = vmax.f32 %v1125, 0.0
        %v1307 = vmax.f32 %v1214, 0.0
        %v1308 = vmax.f32 %v1038, 0.0
        %v1309 = vmax.f32 %v1127, 0.0
        %v1310 = vmax.f32 %v1216, 0.0
        %v1311 = vmax.f32 %v1041, 0.0
        %v1312 = vmax.f32 %v1130, 0.0
        %v1313 = vmax.f32 %v1219, 0.0
        %v1314 = vmax.f32 %v1043, 0.0
        %v1315 = vmax.f32 %v1132, 0.0
        %v1316 = vmax.f32 %v1221, 0.0
        %v1317 = vmax.f32 %v1046, 0.0
        %v1318 = vmax.f32 %v1135, 0.0
        %v1319 = vmax.f32 %v1224, 0.0
        %v1320 = vmax.f32 %v1048, 0.0
        %v1321 = vmax.f32 %v1137, 0.0
        %v1322 = vmax.f32 %v1226, 0.0
        %v1323 = vmax.f32 %v1051, 0.0
        %v1324 = vmax.f32 %v1140, 0.0
        %v1325 = vmax.f32 %v1229, 0.0
        %v1326 = vmax.f32 %v1053, 0.0
        %v1327 = vmax.f32 %v1142, 0.0
        %v1328 = vmax.f32 %v1231, 0.0
        %v1329 = vld [vmem:[%s2] sm:$0xff]
        %v1330 = vld [vmem:[%s2 + $0x8] sm:$0xff]
        %v1331 = vld [vmem:[%s2 + $0x10] sm:$0xff]
        %v1332 = vld [vmem:[%s2 + $0x18] sm:$0xff]
        %v1333 = vld [vmem:[%s2 + $0x20] sm:$0xff]
        %v1334 = vld [vmem:[%s2 + $0x28] sm:$0xff]
        %v1335 = vld [vmem:[%s2 + $0x30] sm:$0xff]
        %v1336 = vld [vmem:[%s2 + $0x38] sm:$0xff]
        %v1337 = vld [vmem:[%s2 + $0x40] sm:$0xff]
        %v1338 = vld [vmem:[%s2 + $0x48] sm:$0xff]
        %v1339 = vld [vmem:[%s2 + $0x50] sm:$0xff]
        %v1340 = vld [vmem:[%s2 + $0x58] sm:$0xff]
        %v1341 = vld [vmem:[%s2 + $0x60] sm:$0xff]
        %v1342 = vld [vmem:[%s2 + $0x68] sm:$0xff]
        %v1343 = vld [vmem:[%s2 + $0x70] sm:$0xff]
        %v1344 = vld [vmem:[%s2 + $0x78] sm:$0xff]
        %v1345 = vld [vmem:[%s2 + $0x80] sm:$0xff]
        %v1346 = vld [vmem:[%s2 + $0x88] sm:$0xff]
        %v1347 = vld [vmem:[%s2 + $0x90] sm:$0xff]
        %v1348 = vld [vmem:[%s2 + $0x98] sm:$0xff]
        %v1349 = vld [vmem:[%s2 + $0xa0] sm:$0xff]
        %v1350 = vld [vmem:[%s2 + $0xa8] sm:$0xff]
        %v1351 = vld [vmem:[%s2 + $0xb0] sm:$0xff]
        %v1352 = vld [vmem:[%s2 + $0xb8] sm:$0xff]
        %v1353 = vld [vmem:[%s2 + $0xc0] sm:$0xff]
        %v1354 = vld [vmem:[%s2 + $0xc8] sm:$0xff]
        %v1355 = vld [vmem:[%s2 + $0xd0] sm:$0xff]
        %v1356 = vld [vmem:[%s2 + $0xd8] sm:$0xff]
        %v1357 = vld [vmem:[%s2 + $0xe0] sm:$0xff]
        %v1358 = vld [vmem:[%s2 + $0xe8] sm:$0xff]
        %v1359 = vld [vmem:[%s2 + $0xf0] sm:$0xff]
        %v1360 = vld [vmem:[%s2 + $0xf8] sm:$0xff]
        %v1361 = vpack.c.bf16 %v1236, %v1233
        %v1362 = vpack.c.bf16 %v1237, %v1234
        %v1363 = vpack.c.bf16 %v1238, %v1235
        %v1364 = vpack.c.bf16 %v1242, %v1239
        %v1365 = vpack.c.bf16 %v1243, %v1240
        %v1366 = vpack.c.bf16 %v1244, %v1241
        %v1367 = vpack.c.bf16 %v1248, %v1245
        %v1368 = vpack.c.bf16 %v1249, %v1246
        %v1369 = vpack.c.bf16 %v1250, %v1247
        %v1370 = vpack.c.bf16 %v1254, %v1251
        %v1371 = vpack.c.bf16 %v1255, %v1252
        %v1372 = vpack.c.bf16 %v1256, %v1253
        %v1373 = vpack.c.bf16 %v1260, %v1257
        %v1374 = vpack.c.bf16 %v1261, %v1258
        %v1375 = vpack.c.bf16 %v1262, %v1259
        %v1376 = vpack.c.bf16 %v1266, %v1263
        %v1377 = vpack.c.bf16 %v1267, %v1264
        %v1378 = vpack.c.bf16 %v1268, %v1265
        %v1379 = vpack.c.bf16 %v1272, %v1269
        %v1380 = vpack.c.bf16 %v1273, %v1270
        %v1381 = vpack.c.bf16 %v1274, %v1271
        %v1382 = vpack.c.bf16 %v1278, %v1275
        %v1383 = vpack.c.bf16 %v1279, %v1276
        %v1384 = vpack.c.bf16 %v1280, %v1277
        %v1385 = vpack.c.bf16 %v1284, %v1281
        %v1386 = vpack.c.bf16 %v1285, %v1282
        %v1387 = vpack.c.bf16 %v1286, %v1283
        %v1388 = vpack.c.bf16 %v1290, %v1287
        %v1389 = vpack.c.bf16 %v1291, %v1288
        %v1390 = vpack.c.bf16 %v1292, %v1289
        %v1391 = vpack.c.bf16 %v1296, %v1293
        %v1392 = vpack.c.bf16 %v1297, %v1294
        %v1393 = vpack.c.bf16 %v1298, %v1295
        %v1394 = vpack.c.bf16 %v1302, %v1299
        %v1395 = vpack.c.bf16 %v1303, %v1300
        %v1396 = vpack.c.bf16 %v1304, %v1301
        %v1397 = vpack.c.bf16 %v1308, %v1305
        %v1398 = vpack.c.bf16 %v1309, %v1306
        %v1399 = vpack.c.bf16 %v1310, %v1307
        %v1400 = vpack.c.bf16 %v1314, %v1311
        %v1401 = vpack.c.bf16 %v1315, %v1312
        %v1402 = vpack.c.bf16 %v1316, %v1313
        %v1403 = vpack.c.bf16 %v1320, %v1317
        %v1404 = vpack.c.bf16 %v1321, %v1318
        %v1405 = vpack.c.bf16 %v1322, %v1319
        %v1406 = vpack.c.bf16 %v1326, %v1323
        %v1407 = vpack.c.bf16 %v1327, %v1324
        %v1408 = vpack.c.bf16 %v1328, %v1325
        %1410 = vset.pattern.permute.xlu0 0
        %1411 = vperm.xlu0 %1410, %v562
        %v1412 = vpop.permute.xlu0 %1411
        %1415 = vset.pattern.permute.xlu0 0
        %1416 = vperm.xlu0 %1415, %v563
        %v1417 = vpop.permute.xlu0 %1416
        %1420 = vset.pattern.permute.xlu0 0
        %1421 = vperm.xlu0 %1420, %v564
        %v1422 = vpop.permute.xlu0 %1421
        %1425 = vset.pattern.permute.xlu0 0
        %1426 = vperm.xlu0 %1425, %v565
        %v1427 = vpop.permute.xlu0 %1426
        %1430 = vset.pattern.permute.xlu0 0
        %1431 = vperm.xlu0 %1430, %v566
        %v1432 = vpop.permute.xlu0 %1431
        %1435 = vset.pattern.permute.xlu0 0
        %1436 = vperm.xlu0 %1435, %v567
        %v1437 = vpop.permute.xlu0 %1436
        %1440 = vset.pattern.permute.xlu0 0
        %1441 = vperm.xlu0 %1440, %v568
        %v1442 = vpop.permute.xlu0 %1441
        %1445 = vset.pattern.permute.xlu0 0
        %1446 = vperm.xlu0 %1445, %v569
        %v1447 = vpop.permute.xlu0 %1446
        %1450 = vset.pattern.permute.xlu0 0
        %1451 = vperm.xlu0 %1450, %v570
        %v1452 = vpop.permute.xlu0 %1451
        %1455 = vset.pattern.permute.xlu0 0
        %1456 = vperm.xlu0 %1455, %v571
        %v1457 = vpop.permute.xlu0 %1456
        %1460 = vset.pattern.permute.xlu0 0
        %1461 = vperm.xlu0 %1460, %v572
        %v1462 = vpop.permute.xlu0 %1461
        %1465 = vset.pattern.permute.xlu0 0
        %1466 = vperm.xlu0 %1465, %v573
        %v1467 = vpop.permute.xlu0 %1466
        %1470 = vset.pattern.permute.xlu0 0
        %1471 = vperm.xlu0 %1470, %v574
        %v1472 = vpop.permute.xlu0 %1471
        %1475 = vset.pattern.permute.xlu0 0
        %1476 = vperm.xlu0 %1475, %v575
        %v1477 = vpop.permute.xlu0 %1476
        %1480 = vset.pattern.permute.xlu0 0
        %1481 = vperm.xlu0 %1480, %v576
        %v1482 = vpop.permute.xlu0 %1481
        %1485 = vset.pattern.permute.xlu0 0
        %1486 = vperm.xlu0 %1485, %v577
        %v1487 = vpop.permute.xlu0 %1486
        %1490 = vset.pattern.permute.xlu0 0
        %1491 = vperm.xlu0 %1490, %v578
        %v1492 = vpop.permute.xlu0 %1491
        %1495 = vset.pattern.permute.xlu0 0
        %1496 = vperm.xlu0 %1495, %v579
        %v1497 = vpop.permute.xlu0 %1496
        %1500 = vset.pattern.permute.xlu0 0
        %1501 = vperm.xlu0 %1500, %v580
        %v1502 = vpop.permute.xlu0 %1501
        %1505 = vset.pattern.permute.xlu0 0
        %1506 = vperm.xlu0 %1505, %v581
        %v1507 = vpop.permute.xlu0 %1506
        %1510 = vset.pattern.permute.xlu0 0
        %1511 = vperm.xlu0 %1510, %v582
        %v1512 = vpop.permute.xlu0 %1511
        %1515 = vset.pattern.permute.xlu0 0
        %1516 = vperm.xlu0 %1515, %v583
        %v1517 = vpop.permute.xlu0 %1516
        %1520 = vset.pattern.permute.xlu0 0
        %1521 = vperm.xlu0 %1520, %v584
        %v1522 = vpop.permute.xlu0 %1521
        %1525 = vset.pattern.permute.xlu0 0
        %1526 = vperm.xlu0 %1525, %v585
        %v1527 = vpop.permute.xlu0 %1526
        %1530 = vset.pattern.permute.xlu0 0
        %1531 = vperm.xlu0 %1530, %v586
        %v1532 = vpop.permute.xlu0 %1531
        %1535 = vset.pattern.permute.xlu0 0
        %1536 = vperm.xlu0 %1535, %v587
        %v1537 = vpop.permute.xlu0 %1536
        %1540 = vset.pattern.permute.xlu0 0
        %1541 = vperm.xlu0 %1540, %v588
        %v1542 = vpop.permute.xlu0 %1541
        %1545 = vset.pattern.permute.xlu0 0
        %1546 = vperm.xlu0 %1545, %v589
        %v1547 = vpop.permute.xlu0 %1546
        %1550 = vset.pattern.permute.xlu0 0
        %1551 = vperm.xlu0 %1550, %v590
        %v1552 = vpop.permute.xlu0 %1551
        %1555 = vset.pattern.permute.xlu0 0
        %1556 = vperm.xlu0 %1555, %v591
        %v1557 = vpop.permute.xlu0 %1556
        %1560 = vset.pattern.permute.xlu0 0
        %1561 = vperm.xlu0 %1560, %v592
        %v1562 = vpop.permute.xlu0 %1561
        %1565 = vset.pattern.permute.xlu0 0
        %1566 = vperm.xlu0 %1565, %v593
        %v1567 = vpop.permute.xlu0 %1566
        %v1601 = vunpack.c.l.b16 %v1329
        %v1602 = vunpack.c.h.b16 %v1329
        %v1603 = vunpack.c.l.b16 %v1330
        %v1604 = vunpack.c.h.b16 %v1330
        %v1605 = vunpack.c.l.b16 %v1331
        %v1606 = vunpack.c.h.b16 %v1331
        %v1607 = vunpack.c.l.b16 %v1332
        %v1608 = vunpack.c.h.b16 %v1332
        %v1609 = vunpack.c.l.b16 %v1333
        %v1610 = vunpack.c.h.b16 %v1333
        %v1611 = vunpack.c.l.b16 %v1334
        %v1612 = vunpack.c.h.b16 %v1334
        %v1613 = vunpack.c.l.b16 %v1335
        %v1614 = vunpack.c.h.b16 %v1335
        %v1615 = vunpack.c.l.b16 %v1336
        %v1616 = vunpack.c.h.b16 %v1336
        %v1617 = vunpack.c.l.b16 %v1337
        %v1618 = vunpack.c.h.b16 %v1337
        %v1619 = vunpack.c.l.b16 %v1338
        %v1620 = vunpack.c.h.b16 %v1338
        %v1621 = vunpack.c.l.b16 %v1339
        %v1622 = vunpack.c.h.b16 %v1339
        %v1623 = vunpack.c.l.b16 %v1340
        %v1624 = vunpack.c.h.b16 %v1340
        %v1625 = vunpack.c.l.b16 %v1341
        %v1626 = vunpack.c.h.b16 %v1341
        %v1627 = vunpack.c.l.b16 %v1342
        %v1628 = vunpack.c.h.b16 %v1342
        %v1629 = vunpack.c.l.b16 %v1343
        %v1630 = vunpack.c.h.b16 %v1343
        %v1631 = vunpack.c.l.b16 %v1344
        %v1632 = vunpack.c.h.b16 %v1344
        %v1633 = vunpack.c.l.b16 %v1345
        %v1634 = vunpack.c.h.b16 %v1345
        %v1635 = vunpack.c.l.b16 %v1346
        %v1636 = vunpack.c.h.b16 %v1346
        %v1637 = vunpack.c.l.b16 %v1347
        %v1638 = vunpack.c.h.b16 %v1347
        %v1639 = vunpack.c.l.b16 %v1348
        %v1640 = vunpack.c.h.b16 %v1348
        %v1641 = vunpack.c.l.b16 %v1349
        %v1642 = vunpack.c.h.b16 %v1349
        %v1643 = vunpack.c.l.b16 %v1350
        %v1644 = vunpack.c.h.b16 %v1350
        %v1645 = vunpack.c.l.b16 %v1351
        %v1646 = vunpack.c.h.b16 %v1351
        %v1647 = vunpack.c.l.b16 %v1352
        %v1648 = vunpack.c.h.b16 %v1352
        %v1649 = vunpack.c.l.b16 %v1353
        %v1650 = vunpack.c.h.b16 %v1353
        %v1651 = vunpack.c.l.b16 %v1354
        %v1652 = vunpack.c.h.b16 %v1354
        %v1653 = vunpack.c.l.b16 %v1355
        %v1654 = vunpack.c.h.b16 %v1355
        %v1655 = vunpack.c.l.b16 %v1356
        %v1656 = vunpack.c.h.b16 %v1356
        %v1657 = vunpack.c.l.b16 %v1357
        %v1658 = vunpack.c.h.b16 %v1357
        %v1659 = vunpack.c.l.b16 %v1358
        %v1660 = vunpack.c.h.b16 %v1358
        %v1661 = vunpack.c.l.b16 %v1359
        %v1662 = vunpack.c.h.b16 %v1359
        %v1663 = vunpack.c.l.b16 %v1360
        %v1664 = vunpack.c.h.b16 %v1360
        %v1665 = vpack.c.b16 %v1603, %v1601
        %v1666 = vpack.c.b16 %v1604, %v1602
        %v1667 = vpack.c.b16 %v1607, %v1605
        %v1668 = vpack.c.b16 %v1608, %v1606
        %v1669 = vpack.c.b16 %v1611, %v1609
        %v1670 = vpack.c.b16 %v1612, %v1610
        %v1671 = vpack.c.b16 %v1615, %v1613
        %v1672 = vpack.c.b16 %v1616, %v1614
        %v1673 = vpack.c.b16 %v1619, %v1617
        %v1674 = vpack.c.b16 %v1620, %v1618
        %v1675 = vpack.c.b16 %v1623, %v1621
        %v1676 = vpack.c.b16 %v1624, %v1622
        %v1677 = vpack.c.b16 %v1627, %v1625
        %v1678 = vpack.c.b16 %v1628, %v1626
        %v1679 = vpack.c.b16 %v1631, %v1629
        %v1680 = vpack.c.b16 %v1632, %v1630
        %v1681 = vpack.c.b16 %v1635, %v1633
        %v1682 = vpack.c.b16 %v1636, %v1634
        %v1683 = vpack.c.b16 %v1639, %v1637
        %v1684 = vpack.c.b16 %v1640, %v1638
        %v1685 = vpack.c.b16 %v1643, %v1641
        %v1686 = vpack.c.b16 %v1644, %v1642
        %v1687 = vpack.c.b16 %v1647, %v1645
        %v1688 = vpack.c.b16 %v1648, %v1646
        %v1689 = vpack.c.b16 %v1651, %v1649
        %v1690 = vpack.c.b16 %v1652, %v1650
        %v1691 = vpack.c.b16 %v1655, %v1653
        %v1692 = vpack.c.b16 %v1656, %v1654
        %v1693 = vpack.c.b16 %v1659, %v1657
        %v1694 = vpack.c.b16 %v1660, %v1658
        %v1695 = vpack.c.b16 %v1663, %v1661
        %v1696 = vpack.c.b16 %v1664, %v1662
        %1729 = vmatpush.bf16.msra.mxu0 %v1382
        %1730 = vmatpush.bf16.msra.mxu0 %v1379
        %1731 = vmatpush.bf16.msra.mxu0 %v1376
        %1732 = vmatpush.bf16.msra.mxu0 %v1373
        %1733 = vmatpush.bf16.msra.mxu0 %v1370
        %1734 = vmatpush.bf16.msra.mxu0 %v1367
        %1735 = vmatpush.bf16.msra.mxu0 %v1364
        %1736 = vmatpush.bf16.msra.mxu0 %v1361
        %1737 = vmatmul.bf16.gmra.mxu0 %v1665
        %v1738 = vpop.f32.mrf.mxu0
        %v1739 = vadd.f32 %v1412, %v1738
        %v1740 = vpop.f32.mrf.mxu0
        %v1741 = vadd.f32 %v1417, %v1740
        %1742 = vmatmul.bf16.gmra.mxu0 %v1667
        %v1743 = vpop.f32.mrf.mxu0
        %v1744 = vadd.f32 %v1422, %v1743
        %v1745 = vpop.f32.mrf.mxu0
        %v1746 = vadd.f32 %v1427, %v1745
        %1747 = vmatmul.bf16.gmra.mxu0 %v1669
        %v1748 = vpop.f32.mrf.mxu0
        %v1749 = vadd.f32 %v1432, %v1748
        %v1750 = vpop.f32.mrf.mxu0
        %v1751 = vadd.f32 %v1437, %v1750
        %1752 = vmatmul.bf16.gmra.mxu0 %v1671
        %v1753 = vpop.f32.mrf.mxu0
        %v1754 = vadd.f32 %v1442, %v1753
        %v1755 = vpop.f32.mrf.mxu0
        %v1756 = vadd.f32 %v1447, %v1755
        %1757 = vmatmul.bf16.gmra.mxu0 %v1673
        %v1758 = vpop.f32.mrf.mxu0
        %v1759 = vadd.f32 %v1452, %v1758
        %v1760 = vpop.f32.mrf.mxu0
        %v1761 = vadd.f32 %v1457, %v1760
        %1762 = vmatmul.bf16.gmra.mxu0 %v1675
        %v1763 = vpop.f32.mrf.mxu0
        %v1764 = vadd.f32 %v1462, %v1763
        %v1765 = vpop.f32.mrf.mxu0
        %v1766 = vadd.f32 %v1467, %v1765
        %1767 = vmatmul.bf16.gmra.mxu0 %v1677
        %v1768 = vpop.f32.mrf.mxu0
        %v1769 = vadd.f32 %v1472, %v1768
        %v1770 = vpop.f32.mrf.mxu0
        %v1771 = vadd.f32 %v1477, %v1770
        %1772 = vmatmul.bf16.gmra.mxu0 %v1679
        %v1773 = vpop.f32.mrf.mxu0
        %v1774 = vadd.f32 %v1482, %v1773
        %v1775 = vpop.f32.mrf.mxu0
        %v1776 = vadd.f32 %v1487, %v1775
        %1777 = vmatmul.bf16.gmra.mxu0 %v1681
        %v1778 = vpop.f32.mrf.mxu0
        %v1779 = vadd.f32 %v1492, %v1778
        %v1780 = vpop.f32.mrf.mxu0
        %v1781 = vadd.f32 %v1497, %v1780
        %1782 = vmatmul.bf16.gmra.mxu0 %v1683
        %v1783 = vpop.f32.mrf.mxu0
        %v1784 = vadd.f32 %v1502, %v1783
        %v1785 = vpop.f32.mrf.mxu0
        %v1786 = vadd.f32 %v1507, %v1785
        %1787 = vmatmul.bf16.gmra.mxu0 %v1685
        %v1788 = vpop.f32.mrf.mxu0
        %v1789 = vadd.f32 %v1512, %v1788
        %v1790 = vpop.f32.mrf.mxu0
        %v1791 = vadd.f32 %v1517, %v1790
        %1792 = vmatmul.bf16.gmra.mxu0 %v1687
        %v1793 = vpop.f32.mrf.mxu0
        %v1794 = vadd.f32 %v1522, %v1793
        %v1795 = vpop.f32.mrf.mxu0
        %v1796 = vadd.f32 %v1527, %v1795
        %1797 = vmatmul.bf16.gmra.mxu0 %v1689
        %v1798 = vpop.f32.mrf.mxu0
        %v1799 = vadd.f32 %v1532, %v1798
        %v1800 = vpop.f32.mrf.mxu0
        %v1801 = vadd.f32 %v1537, %v1800
        %1802 = vmatmul.bf16.gmra.mxu0 %v1691
        %v1803 = vpop.f32.mrf.mxu0
        %v1804 = vadd.f32 %v1542, %v1803
        %v1805 = vpop.f32.mrf.mxu0
        %v1806 = vadd.f32 %v1547, %v1805
        %1807 = vmatmul.bf16.gmra.mxu0 %v1693
        %v1808 = vpop.f32.mrf.mxu0
        %v1809 = vadd.f32 %v1552, %v1808
        %v1810 = vpop.f32.mrf.mxu0
        %v1811 = vadd.f32 %v1557, %v1810
        %1812 = vmatmul.bf16.gmra.mxu0 %v1695
        %v1813 = vpop.f32.mrf.mxu0
        %v1814 = vadd.f32 %v1562, %v1813
        %v1815 = vpop.f32.mrf.mxu0
        %v1816 = vadd.f32 %v1567, %v1815
        %1817 = vdwg.mxu0
        %1818 = vmatpush.bf16.msra.mxu0 %v1406
        %1819 = vmatpush.bf16.msra.mxu0 %v1403
        %1820 = vmatpush.bf16.msra.mxu0 %v1400
        %1821 = vmatpush.bf16.msra.mxu0 %v1397
        %1822 = vmatpush.bf16.msra.mxu0 %v1394
        %1823 = vmatpush.bf16.msra.mxu0 %v1391
        %1824 = vmatpush.bf16.msra.mxu0 %v1388
        %1825 = vmatpush.bf16.msra.mxu0 %v1385
        %1826 = vmatmul.bf16.gmra.mxu0 %v1666
        %v1827 = vpop.f32.mrf.mxu0
        %v1828 = vadd.f32 %v1739, %v1827
        %v1829 = vpop.f32.mrf.mxu0
        %v1830 = vadd.f32 %v1741, %v1829
        %1831 = vmatmul.bf16.gmra.mxu0 %v1668
        %v1832 = vpop.f32.mrf.mxu0
        %v1833 = vadd.f32 %v1744, %v1832
        %v1834 = vpop.f32.mrf.mxu0
        %v1835 = vadd.f32 %v1746, %v1834
        %1836 = vmatmul.bf16.gmra.mxu0 %v1670
        %v1837 = vpop.f32.mrf.mxu0
        %v1838 = vadd.f32 %v1749, %v1837
        %v1839 = vpop.f32.mrf.mxu0
        %v1840 = vadd.f32 %v1751, %v1839
        %1841 = vmatmul.bf16.gmra.mxu0 %v1672
        %v1842 = vpop.f32.mrf.mxu0
        %v1843 = vadd.f32 %v1754, %v1842
        %v1844 = vpop.f32.mrf.mxu0
        %v1845 = vadd.f32 %v1756, %v1844
        %1846 = vmatmul.bf16.gmra.mxu0 %v1674
        %v1847 = vpop.f32.mrf.mxu0
        %v1848 = vadd.f32 %v1759, %v1847
        %v1849 = vpop.f32.mrf.mxu0
        %v1850 = vadd.f32 %v1761, %v1849
        %1851 = vmatmul.bf16.gmra.mxu0 %v1676
        %v1852 = vpop.f32.mrf.mxu0
        %v1853 = vadd.f32 %v1764, %v1852
        %v1854 = vpop.f32.mrf.mxu0
        %v1855 = vadd.f32 %v1766, %v1854
        %1856 = vmatmul.bf16.gmra.mxu0 %v1678
        %v1857 = vpop.f32.mrf.mxu0
        %v1858 = vadd.f32 %v1769, %v1857
        %v1859 = vpop.f32.mrf.mxu0
        %v1860 = vadd.f32 %v1771, %v1859
        %1861 = vmatmul.bf16.gmra.mxu0 %v1680
        %v1862 = vpop.f32.mrf.mxu0
        %v1863 = vadd.f32 %v1774, %v1862
        %v1864 = vpop.f32.mrf.mxu0
        %v1865 = vadd.f32 %v1776, %v1864
        %1866 = vmatmul.bf16.gmra.mxu0 %v1682
        %v1867 = vpop.f32.mrf.mxu0
        %v1868 = vadd.f32 %v1779, %v1867
        %v1869 = vpop.f32.mrf.mxu0
        %v1870 = vadd.f32 %v1781, %v1869
        %1871 = vmatmul.bf16.gmra.mxu0 %v1684
        %v1872 = vpop.f32.mrf.mxu0
        %v1873 = vadd.f32 %v1784, %v1872
        %v1874 = vpop.f32.mrf.mxu0
        %v1875 = vadd.f32 %v1786, %v1874
        %1876 = vmatmul.bf16.gmra.mxu0 %v1686
        %v1877 = vpop.f32.mrf.mxu0
        %v1878 = vadd.f32 %v1789, %v1877
        %v1879 = vpop.f32.mrf.mxu0
        %v1880 = vadd.f32 %v1791, %v1879
        %1881 = vmatmul.bf16.gmra.mxu0 %v1688
        %v1882 = vpop.f32.mrf.mxu0
        %v1883 = vadd.f32 %v1794, %v1882
        %v1884 = vpop.f32.mrf.mxu0
        %v1885 = vadd.f32 %v1796, %v1884
        %1886 = vmatmul.bf16.gmra.mxu0 %v1690
        %v1887 = vpop.f32.mrf.mxu0
        %v1888 = vadd.f32 %v1799, %v1887
        %v1889 = vpop.f32.mrf.mxu0
        %v1890 = vadd.f32 %v1801, %v1889
        %1891 = vmatmul.bf16.gmra.mxu0 %v1692
        %v1892 = vpop.f32.mrf.mxu0
        %v1893 = vadd.f32 %v1804, %v1892
        %v1894 = vpop.f32.mrf.mxu0
        %v1895 = vadd.f32 %v1806, %v1894
        %1896 = vmatmul.bf16.gmra.mxu0 %v1694
        %v1897 = vpop.f32.mrf.mxu0
        %v1898 = vadd.f32 %v1809, %v1897
        %v1899 = vpop.f32.mrf.mxu0
        %v1900 = vadd.f32 %v1811, %v1899
        %1901 = vmatmul.bf16.gmra.mxu0 %v1696
        %v1902 = vpop.f32.mrf.mxu0
        %v1903 = vadd.f32 %v1814, %v1902
        %v1904 = vpop.f32.mrf.mxu0
        %v1905 = vadd.f32 %v1816, %v1904
        %1906 = vdwg.mxu0
        %1907 = vmatpush.bf16.msra.mxu0 %v1383
        %1908 = vmatpush.bf16.msra.mxu0 %v1380
        %1909 = vmatpush.bf16.msra.mxu0 %v1377
        %1910 = vmatpush.bf16.msra.mxu0 %v1374
        %1911 = vmatpush.bf16.msra.mxu0 %v1371
        %1912 = vmatpush.bf16.msra.mxu0 %v1368
        %1913 = vmatpush.bf16.msra.mxu0 %v1365
        %1914 = vmatpush.bf16.msra.mxu0 %v1362
        %1915 = vmatmul.bf16.gmra.mxu0 %v1665
        %v1916 = vpop.f32.mrf.mxu0
        %v1917 = vadd.f32 %v1412, %v1916
        %v1918 = vpop.f32.mrf.mxu0
        %v1919 = vadd.f32 %v1417, %v1918
        %1920 = vmatmul.bf16.gmra.mxu0 %v1667
        %v1921 = vpop.f32.mrf.mxu0
        %v1922 = vadd.f32 %v1422, %v1921
        %v1923 = vpop.f32.mrf.mxu0
        %v1924 = vadd.f32 %v1427, %v1923
        %1925 = vmatmul.bf16.gmra.mxu0 %v1669
        %v1926 = vpop.f32.mrf.mxu0
        %v1927 = vadd.f32 %v1432, %v1926
        %v1928 = vpop.f32.mrf.mxu0
        %v1929 = vadd.f32 %v1437, %v1928
        %1930 = vmatmul.bf16.gmra.mxu0 %v1671
        %v1931 = vpop.f32.mrf.mxu0
        %v1932 = vadd.f32 %v1442, %v1931
        %v1933 = vpop.f32.mrf.mxu0
        %v1934 = vadd.f32 %v1447, %v1933
        %1935 = vmatmul.bf16.gmra.mxu0 %v1673
        %v1936 = vpop.f32.mrf.mxu0
        %v1937 = vadd.f32 %v1452, %v1936
        %v1938 = vpop.f32.mrf.mxu0
        %v1939 = vadd.f32 %v1457, %v1938
        %1940 = vmatmul.bf16.gmra.mxu0 %v1675
        %v1941 = vpop.f32.mrf.mxu0
        %v1942 = vadd.f32 %v1462, %v1941
        %v1943 = vpop.f32.mrf.mxu0
        %v1944 = vadd.f32 %v1467, %v1943
        %1945 = vmatmul.bf16.gmra.mxu0 %v1677
        %v1946 = vpop.f32.mrf.mxu0
        %v1947 = vadd.f32 %v1472, %v1946
        %v1948 = vpop.f32.mrf.mxu0
        %v1949 = vadd.f32 %v1477, %v1948
        %1950 = vmatmul.bf16.gmra.mxu0 %v1679
        %v1951 = vpop.f32.mrf.mxu0
        %v1952 = vadd.f32 %v1482, %v1951
        %v1953 = vpop.f32.mrf.mxu0
        %v1954 = vadd.f32 %v1487, %v1953
        %1955 = vmatmul.bf16.gmra.mxu0 %v1681
        %v1956 = vpop.f32.mrf.mxu0
        %v1957 = vadd.f32 %v1492, %v1956
        %v1958 = vpop.f32.mrf.mxu0
        %v1959 = vadd.f32 %v1497, %v1958
        %1960 = vmatmul.bf16.gmra.mxu0 %v1683
        %v1961 = vpop.f32.mrf.mxu0
        %v1962 = vadd.f32 %v1502, %v1961
        %v1963 = vpop.f32.mrf.mxu0
        %v1964 = vadd.f32 %v1507, %v1963
        %1965 = vmatmul.bf16.gmra.mxu0 %v1685
        %v1966 = vpop.f32.mrf.mxu0
        %v1967 = vadd.f32 %v1512, %v1966
        %v1968 = vpop.f32.mrf.mxu0
        %v1969 = vadd.f32 %v1517, %v1968
        %1970 = vmatmul.bf16.gmra.mxu0 %v1687
        %v1971 = vpop.f32.mrf.mxu0
        %v1972 = vadd.f32 %v1522, %v1971
        %v1973 = vpop.f32.mrf.mxu0
        %v1974 = vadd.f32 %v1527, %v1973
        %1975 = vmatmul.bf16.gmra.mxu0 %v1689
        %v1976 = vpop.f32.mrf.mxu0
        %v1977 = vadd.f32 %v1532, %v1976
        %v1978 = vpop.f32.mrf.mxu0
        %v1979 = vadd.f32 %v1537, %v1978
        %1980 = vmatmul.bf16.gmra.mxu0 %v1691
        %v1981 = vpop.f32.mrf.mxu0
        %v1982 = vadd.f32 %v1542, %v1981
        %v1983 = vpop.f32.mrf.mxu0
        %v1984 = vadd.f32 %v1547, %v1983
        %1985 = vmatmul.bf16.gmra.mxu0 %v1693
        %v1986 = vpop.f32.mrf.mxu0
        %v1987 = vadd.f32 %v1552, %v1986
        %v1988 = vpop.f32.mrf.mxu0
        %v1989 = vadd.f32 %v1557, %v1988
        %1990 = vmatmul.bf16.gmra.mxu0 %v1695
        %v1991 = vpop.f32.mrf.mxu0
        %v1992 = vadd.f32 %v1562, %v1991
        %v1993 = vpop.f32.mrf.mxu0
        %v1994 = vadd.f32 %v1567, %v1993
        %1995 = vdwg.mxu0
        %1996 = vmatpush.bf16.msra.mxu0 %v1407
        %1997 = vmatpush.bf16.msra.mxu0 %v1404
        %1998 = vmatpush.bf16.msra.mxu0 %v1401
        %1999 = vmatpush.bf16.msra.mxu0 %v1398
        %2000 = vmatpush.bf16.msra.mxu0 %v1395
        %2001 = vmatpush.bf16.msra.mxu0 %v1392
        %2002 = vmatpush.bf16.msra.mxu0 %v1389
        %2003 = vmatpush.bf16.msra.mxu0 %v1386
        %2004 = vmatmul.bf16.gmra.mxu0 %v1666
        %v2005 = vpop.f32.mrf.mxu0
        %v2006 = vadd.f32 %v1917, %v2005
        %v2007 = vpop.f32.mrf.mxu0
        %v2008 = vadd.f32 %v1919, %v2007
        %2009 = vmatmul.bf16.gmra.mxu0 %v1668
        %v2010 = vpop.f32.mrf.mxu0
        %v2011 = vadd.f32 %v1922, %v2010
        %v2012 = vpop.f32.mrf.mxu0
        %v2013 = vadd.f32 %v1924, %v2012
        %2014 = vmatmul.bf16.gmra.mxu0 %v1670
        %v2015 = vpop.f32.mrf.mxu0
        %v2016 = vadd.f32 %v1927, %v2015
        %v2017 = vpop.f32.mrf.mxu0
        %v2018 = vadd.f32 %v1929, %v2017
        %2019 = vmatmul.bf16.gmra.mxu0 %v1672
        %v2020 = vpop.f32.mrf.mxu0
        %v2021 = vadd.f32 %v1932, %v2020
        %v2022 = vpop.f32.mrf.mxu0
        %v2023 = vadd.f32 %v1934, %v2022
        %2024 = vmatmul.bf16.gmra.mxu0 %v1674
        %v2025 = vpop.f32.mrf.mxu0
        %v2026 = vadd.f32 %v1937, %v2025
        %v2027 = vpop.f32.mrf.mxu0
        %v2028 = vadd.f32 %v1939, %v2027
        %2029 = vmatmul.bf16.gmra.mxu0 %v1676
        %v2030 = vpop.f32.mrf.mxu0
        %v2031 = vadd.f32 %v1942, %v2030
        %v2032 = vpop.f32.mrf.mxu0
        %v2033 = vadd.f32 %v1944, %v2032
        %2034 = vmatmul.bf16.gmra.mxu0 %v1678
        %v2035 = vpop.f32.mrf.mxu0
        %v2036 = vadd.f32 %v1947, %v2035
        %v2037 = vpop.f32.mrf.mxu0
        %v2038 = vadd.f32 %v1949, %v2037
        %2039 = vmatmul.bf16.gmra.mxu0 %v1680
        %v2040 = vpop.f32.mrf.mxu0
        %v2041 = vadd.f32 %v1952, %v2040
        %v2042 = vpop.f32.mrf.mxu0
        %v2043 = vadd.f32 %v1954, %v2042
        %2044 = vmatmul.bf16.gmra.mxu0 %v1682
        %v2045 = vpop.f32.mrf.mxu0
        %v2046 = vadd.f32 %v1957, %v2045
        %v2047 = vpop.f32.mrf.mxu0
        %v2048 = vadd.f32 %v1959, %v2047
        %2049 = vmatmul.bf16.gmra.mxu0 %v1684
        %v2050 = vpop.f32.mrf.mxu0
        %v2051 = vadd.f32 %v1962, %v2050
        %v2052 = vpop.f32.mrf.mxu0
        %v2053 = vadd.f32 %v1964, %v2052
        %2054 = vmatmul.bf16.gmra.mxu0 %v1686
        %v2055 = vpop.f32.mrf.mxu0
        %v2056 = vadd.f32 %v1967, %v2055
        %v2057 = vpop.f32.mrf.mxu0
        %v2058 = vadd.f32 %v1969, %v2057
        %2059 = vmatmul.bf16.gmra.mxu0 %v1688
        %v2060 = vpop.f32.mrf.mxu0
        %v2061 = vadd.f32 %v1972, %v2060
        %v2062 = vpop.f32.mrf.mxu0
        %v2063 = vadd.f32 %v1974, %v2062
        %2064 = vmatmul.bf16.gmra.mxu0 %v1690
        %v2065 = vpop.f32.mrf.mxu0
        %v2066 = vadd.f32 %v1977, %v2065
        %v2067 = vpop.f32.mrf.mxu0
        %v2068 = vadd.f32 %v1979, %v2067
        %2069 = vmatmul.bf16.gmra.mxu0 %v1692
        %v2070 = vpop.f32.mrf.mxu0
        %v2071 = vadd.f32 %v1982, %v2070
        %v2072 = vpop.f32.mrf.mxu0
        %v2073 = vadd.f32 %v1984, %v2072
        %2074 = vmatmul.bf16.gmra.mxu0 %v1694
        %v2075 = vpop.f32.mrf.mxu0
        %v2076 = vadd.f32 %v1987, %v2075
        %v2077 = vpop.f32.mrf.mxu0
        %v2078 = vadd.f32 %v1989, %v2077
        %2079 = vmatmul.bf16.gmra.mxu0 %v1696
        %v2080 = vpop.f32.mrf.mxu0
        %v2081 = vadd.f32 %v1992, %v2080
        %v2082 = vpop.f32.mrf.mxu0
        %v2083 = vadd.f32 %v1994, %v2082
        %2084 = vdwg.mxu0
        %2085 = vmatpush.bf16.msra.mxu0 %v1384
        %2086 = vmatpush.bf16.msra.mxu0 %v1381
        %2087 = vmatpush.bf16.msra.mxu0 %v1378
        %2088 = vmatpush.bf16.msra.mxu0 %v1375
        %2089 = vmatpush.bf16.msra.mxu0 %v1372
        %2090 = vmatpush.bf16.msra.mxu0 %v1369
        %2091 = vmatpush.bf16.msra.mxu0 %v1366
        %2092 = vmatpush.bf16.msra.mxu0 %v1363
        %2093 = vmatmul.bf16.gmra.mxu0 %v1665
        %v2094 = vpop.f32.mrf.mxu0
        %v2095 = vadd.f32 %v1412, %v2094
        %v2096 = vpop.f32.mrf.mxu0
        %v2097 = vadd.f32 %v1417, %v2096
        %2098 = vmatmul.bf16.gmra.mxu0 %v1667
        %v2099 = vpop.f32.mrf.mxu0
        %v2100 = vadd.f32 %v1422, %v2099
        %v2101 = vpop.f32.mrf.mxu0
        %v2102 = vadd.f32 %v1427, %v2101
        %2103 = vmatmul.bf16.gmra.mxu0 %v1669
        %v2104 = vpop.f32.mrf.mxu0
        %v2105 = vadd.f32 %v1432, %v2104
        %v2106 = vpop.f32.mrf.mxu0
        %v2107 = vadd.f32 %v1437, %v2106
        %2108 = vmatmul.bf16.gmra.mxu0 %v1671
        %v2109 = vpop.f32.mrf.mxu0
        %v2110 = vadd.f32 %v1442, %v2109
        %v2111 = vpop.f32.mrf.mxu0
        %v2112 = vadd.f32 %v1447, %v2111
        %2113 = vmatmul.bf16.gmra.mxu0 %v1673
        %v2114 = vpop.f32.mrf.mxu0
        %v2115 = vadd.f32 %v1452, %v2114
        %v2116 = vpop.f32.mrf.mxu0
        %v2117 = vadd.f32 %v1457, %v2116
        %2118 = vmatmul.bf16.gmra.mxu0 %v1675
        %v2119 = vpop.f32.mrf.mxu0
        %v2120 = vadd.f32 %v1462, %v2119
        %v2121 = vpop.f32.mrf.mxu0
        %v2122 = vadd.f32 %v1467, %v2121
        %2123 = vmatmul.bf16.gmra.mxu0 %v1677
        %v2124 = vpop.f32.mrf.mxu0
        %v2125 = vadd.f32 %v1472, %v2124
        %v2126 = vpop.f32.mrf.mxu0
        %v2127 = vadd.f32 %v1477, %v2126
        %2128 = vmatmul.bf16.gmra.mxu0 %v1679
        %v2129 = vpop.f32.mrf.mxu0
        %v2130 = vadd.f32 %v1482, %v2129
        %v2131 = vpop.f32.mrf.mxu0
        %v2132 = vadd.f32 %v1487, %v2131
        %2133 = vmatmul.bf16.gmra.mxu0 %v1681
        %v2134 = vpop.f32.mrf.mxu0
        %v2135 = vadd.f32 %v1492, %v2134
        %v2136 = vpop.f32.mrf.mxu0
        %v2137 = vadd.f32 %v1497, %v2136
        %2138 = vmatmul.bf16.gmra.mxu0 %v1683
        %v2139 = vpop.f32.mrf.mxu0
        %v2140 = vadd.f32 %v1502, %v2139
        %v2141 = vpop.f32.mrf.mxu0
        %v2142 = vadd.f32 %v1507, %v2141
        %2143 = vmatmul.bf16.gmra.mxu0 %v1685
        %v2144 = vpop.f32.mrf.mxu0
        %v2145 = vadd.f32 %v1512, %v2144
        %v2146 = vpop.f32.mrf.mxu0
        %v2147 = vadd.f32 %v1517, %v2146
        %2148 = vmatmul.bf16.gmra.mxu0 %v1687
        %v2149 = vpop.f32.mrf.mxu0
        %v2150 = vadd.f32 %v1522, %v2149
        %v2151 = vpop.f32.mrf.mxu0
        %v2152 = vadd.f32 %v1527, %v2151
        %2153 = vmatmul.bf16.gmra.mxu0 %v1689
        %v2154 = vpop.f32.mrf.mxu0
        %v2155 = vadd.f32 %v1532, %v2154
        %v2156 = vpop.f32.mrf.mxu0
        %v2157 = vadd.f32 %v1537, %v2156
        %2158 = vmatmul.bf16.gmra.mxu0 %v1691
        %v2159 = vpop.f32.mrf.mxu0
        %v2160 = vadd.f32 %v1542, %v2159
        %v2161 = vpop.f32.mrf.mxu0
        %v2162 = vadd.f32 %v1547, %v2161
        %2163 = vmatmul.bf16.gmra.mxu0 %v1693
        %v2164 = vpop.f32.mrf.mxu0
        %v2165 = vadd.f32 %v1552, %v2164
        %v2166 = vpop.f32.mrf.mxu0
        %v2167 = vadd.f32 %v1557, %v2166
        %2168 = vmatmul.bf16.gmra.mxu0 %v1695
        %v2169 = vpop.f32.mrf.mxu0
        %v2170 = vadd.f32 %v1562, %v2169
        %v2171 = vpop.f32.mrf.mxu0
        %v2172 = vadd.f32 %v1567, %v2171
        %2173 = vdwg.mxu0
        %2174 = vmatpush.bf16.msra.mxu0 %v1408
        %2175 = vmatpush.bf16.msra.mxu0 %v1405
        %2176 = vmatpush.bf16.msra.mxu0 %v1402
        %2177 = vmatpush.bf16.msra.mxu0 %v1399
        %2178 = vmatpush.bf16.msra.mxu0 %v1396
        %2179 = vmatpush.bf16.msra.mxu0 %v1393
        %2180 = vmatpush.bf16.msra.mxu0 %v1390
        %2181 = vmatpush.bf16.msra.mxu0 %v1387
        %2182 = vmatmul.bf16.gmra.mxu0 %v1666
        %v2183 = vpop.f32.mrf.mxu0
        %v2184 = vadd.f32 %v2095, %v2183
        %v2185 = vpop.f32.mrf.mxu0
        %v2186 = vadd.f32 %v2097, %v2185
        %2187 = vmatmul.bf16.gmra.mxu0 %v1668
        %v2188 = vpop.f32.mrf.mxu0
        %v2189 = vadd.f32 %v2100, %v2188
        %v2190 = vpop.f32.mrf.mxu0
        %v2191 = vadd.f32 %v2102, %v2190
        %2192 = vmatmul.bf16.gmra.mxu0 %v1670
        %v2193 = vpop.f32.mrf.mxu0
        %v2194 = vadd.f32 %v2105, %v2193
        %v2195 = vpop.f32.mrf.mxu0
        %v2196 = vadd.f32 %v2107, %v2195
        %2197 = vmatmul.bf16.gmra.mxu0 %v1672
        %v2198 = vpop.f32.mrf.mxu0
        %v2199 = vadd.f32 %v2110, %v2198
        %v2200 = vpop.f32.mrf.mxu0
        %v2201 = vadd.f32 %v2112, %v2200
        %2202 = vmatmul.bf16.gmra.mxu0 %v1674
        %v2203 = vpop.f32.mrf.mxu0
        %v2204 = vadd.f32 %v2115, %v2203
        %v2205 = vpop.f32.mrf.mxu0
        %v2206 = vadd.f32 %v2117, %v2205
        %2207 = vmatmul.bf16.gmra.mxu0 %v1676
        %v2208 = vpop.f32.mrf.mxu0
        %v2209 = vadd.f32 %v2120, %v2208
        %v2210 = vpop.f32.mrf.mxu0
        %v2211 = vadd.f32 %v2122, %v2210
        %2212 = vmatmul.bf16.gmra.mxu0 %v1678
        %v2213 = vpop.f32.mrf.mxu0
        %v2214 = vadd.f32 %v2125, %v2213
        %v2215 = vpop.f32.mrf.mxu0
        %v2216 = vadd.f32 %v2127, %v2215
        %2217 = vmatmul.bf16.gmra.mxu0 %v1680
        %v2218 = vpop.f32.mrf.mxu0
        %v2219 = vadd.f32 %v2130, %v2218
        %v2220 = vpop.f32.mrf.mxu0
        %v2221 = vadd.f32 %v2132, %v2220
        %2222 = vmatmul.bf16.gmra.mxu0 %v1682
        %v2223 = vpop.f32.mrf.mxu0
        %v2224 = vadd.f32 %v2135, %v2223
        %v2225 = vpop.f32.mrf.mxu0
        %v2226 = vadd.f32 %v2137, %v2225
        %2227 = vmatmul.bf16.gmra.mxu0 %v1684
        %v2228 = vpop.f32.mrf.mxu0
        %v2229 = vadd.f32 %v2140, %v2228
        %v2230 = vpop.f32.mrf.mxu0
        %v2231 = vadd.f32 %v2142, %v2230
        %2232 = vmatmul.bf16.gmra.mxu0 %v1686
        %v2233 = vpop.f32.mrf.mxu0
        %v2234 = vadd.f32 %v2145, %v2233
        %v2235 = vpop.f32.mrf.mxu0
        %v2236 = vadd.f32 %v2147, %v2235
        %2237 = vmatmul.bf16.gmra.mxu0 %v1688
        %v2238 = vpop.f32.mrf.mxu0
        %v2239 = vadd.f32 %v2150, %v2238
        %v2240 = vpop.f32.mrf.mxu0
        %v2241 = vadd.f32 %v2152, %v2240
        %2242 = vmatmul.bf16.gmra.mxu0 %v1690
        %v2243 = vpop.f32.mrf.mxu0
        %v2244 = vadd.f32 %v2155, %v2243
        %v2245 = vpop.f32.mrf.mxu0
        %v2246 = vadd.f32 %v2157, %v2245
        %2247 = vmatmul.bf16.gmra.mxu0 %v1692
        %v2248 = vpop.f32.mrf.mxu0
        %v2249 = vadd.f32 %v2160, %v2248
        %v2250 = vpop.f32.mrf.mxu0
        %v2251 = vadd.f32 %v2162, %v2250
        %2252 = vmatmul.bf16.gmra.mxu0 %v1694
        %v2253 = vpop.f32.mrf.mxu0
        %v2254 = vadd.f32 %v2165, %v2253
        %v2255 = vpop.f32.mrf.mxu0
        %v2256 = vadd.f32 %v2167, %v2255
        %2257 = vmatmul.bf16.gmra.mxu0 %v1696
        %v2258 = vpop.f32.mrf.mxu0
        %v2259 = vadd.f32 %v2170, %v2258
        %v2260 = vpop.f32.mrf.mxu0
        %v2261 = vadd.f32 %v2172, %v2260
        %2262 = vdwg.mxu0
        %v2263 = vmax.f32 %v1828, 0.0
        %v2264 = vmax.f32 %v2006, 0.0
        %v2265 = vmax.f32 %v2184, 0.0
        %v2266 = vmax.f32 %v1830, 0.0
        %v2267 = vmax.f32 %v2008, 0.0
        %v2268 = vmax.f32 %v2186, 0.0
        %v2269 = vmax.f32 %v1833, 0.0
        %v2270 = vmax.f32 %v2011, 0.0
        %v2271 = vmax.f32 %v2189, 0.0
        %v2272 = vmax.f32 %v1835, 0.0
        %v2273 = vmax.f32 %v2013, 0.0
        %v2274 = vmax.f32 %v2191, 0.0
        %v2275 = vmax.f32 %v1838, 0.0
        %v2276 = vmax.f32 %v2016, 0.0
        %v2277 = vmax.f32 %v2194, 0.0
        %v2278 = vmax.f32 %v1840, 0.0
        %v2279 = vmax.f32 %v2018, 0.0
        %v2280 = vmax.f32 %v2196, 0.0
        %v2281 = vmax.f32 %v1843, 0.0
        %v2282 = vmax.f32 %v2021, 0.0
        %v2283 = vmax.f32 %v2199, 0.0
        %v2284 = vmax.f32 %v1845, 0.0
        %v2285 = vmax.f32 %v2023, 0.0
        %v2286 = vmax.f32 %v2201, 0.0
        %v2287 = vmax.f32 %v1848, 0.0
        %v2288 = vmax.f32 %v2026, 0.0
        %v2289 = vmax.f32 %v2204, 0.0
        %v2290 = vmax.f32 %v1850, 0.0
        %v2291 = vmax.f32 %v2028, 0.0
        %v2292 = vmax.f32 %v2206, 0.0
        %v2293 = vmax.f32 %v1853, 0.0
        %v2294 = vmax.f32 %v2031, 0.0
        %v2295 = vmax.f32 %v2209, 0.0
        %v2296 = vmax.f32 %v1855, 0.0
        %v2297 = vmax.f32 %v2033, 0.0
        %v2298 = vmax.f32 %v2211, 0.0
        %v2299 = vmax.f32 %v1858, 0.0
        %v2300 = vmax.f32 %v2036, 0.0
        %v2301 = vmax.f32 %v2214, 0.0
        %v2302 = vmax.f32 %v1860, 0.0
        %v2303 = vmax.f32 %v2038, 0.0
        %v2304 = vmax.f32 %v2216, 0.0
        %v2305 = vmax.f32 %v1863, 0.0
        %v2306 = vmax.f32 %v2041, 0.0
        %v2307 = vmax.f32 %v2219, 0.0
        %v2308 = vmax.f32 %v1865, 0.0
        %v2309 = vmax.f32 %v2043, 0.0
        %v2310 = vmax.f32 %v2221, 0.0
        %v2311 = vmax.f32 %v1868, 0.0
        %v2312 = vmax.f32 %v2046, 0.0
        %v2313 = vmax.f32 %v2224, 0.0
        %v2314 = vmax.f32 %v1870, 0.0
        %v2315 = vmax.f32 %v2048, 0.0
        %v2316 = vmax.f32 %v2226, 0.0
        %v2317 = vmax.f32 %v1873, 0.0
        %v2318 = vmax.f32 %v2051, 0.0
        %v2319 = vmax.f32 %v2229, 0.0
        %v2320 = vmax.f32 %v1875, 0.0
        %v2321 = vmax.f32 %v2053, 0.0
        %v2322 = vmax.f32 %v2231, 0.0
        %v2323 = vmax.f32 %v1878, 0.0
        %v2324 = vmax.f32 %v2056, 0.0
        %v2325 = vmax.f32 %v2234, 0.0
        %v2326 = vmax.f32 %v1880, 0.0
        %v2327 = vmax.f32 %v2058, 0.0
        %v2328 = vmax.f32 %v2236, 0.0
        %v2329 = vmax.f32 %v1883, 0.0
        %v2330 = vmax.f32 %v2061, 0.0
        %v2331 = vmax.f32 %v2239, 0.0
        %v2332 = vmax.f32 %v1885, 0.0
        %v2333 = vmax.f32 %v2063, 0.0
        %v2334 = vmax.f32 %v2241, 0.0
        %v2335 = vmax.f32 %v1888, 0.0
        %v2336 = vmax.f32 %v2066, 0.0
        %v2337 = vmax.f32 %v2244, 0.0
        %v2338 = vmax.f32 %v1890, 0.0
        %v2339 = vmax.f32 %v2068, 0.0
        %v2340 = vmax.f32 %v2246, 0.0
        %v2341 = vmax.f32 %v1893, 0.0
        %v2342 = vmax.f32 %v2071, 0.0
        %v2343 = vmax.f32 %v2249, 0.0
        %v2344 = vmax.f32 %v1895, 0.0
        %v2345 = vmax.f32 %v2073, 0.0
        %v2346 = vmax.f32 %v2251, 0.0
        %v2347 = vmax.f32 %v1898, 0.0
        %v2348 = vmax.f32 %v2076, 0.0
        %v2349 = vmax.f32 %v2254, 0.0
        %v2350 = vmax.f32 %v1900, 0.0
        %v2351 = vmax.f32 %v2078, 0.0
        %v2352 = vmax.f32 %v2256, 0.0
        %v2353 = vmax.f32 %v1903, 0.0
        %v2354 = vmax.f32 %v2081, 0.0
        %v2355 = vmax.f32 %v2259, 0.0
        %v2356 = vmax.f32 %v1905, 0.0
        %v2357 = vmax.f32 %v2083, 0.0
        %v2358 = vmax.f32 %v2261, 0.0
        %2360 = vset.pattern.permute.xlu0 0
        %2361 = vperm.xlu0 %2360, %v595
        %v2362 = vpop.permute.xlu0 %2361
        %2365 = vset.pattern.permute.xlu0 0
        %2366 = vperm.xlu0 %2365, %v596
        %v2367 = vpop.permute.xlu0 %2366
        %2370 = vset.pattern.permute.xlu0 0
        %2371 = vperm.xlu0 %2370, %v597
        %v2372 = vpop.permute.xlu0 %2371
        %2375 = vset.pattern.permute.xlu0 0
        %2376 = vperm.xlu0 %2375, %v598
        %v2377 = vpop.permute.xlu0 %2376
        %2380 = vset.pattern.permute.xlu0 0
        %2381 = vperm.xlu0 %2380, %v599
        %v2382 = vpop.permute.xlu0 %2381
        %2385 = vset.pattern.permute.xlu0 0
        %2386 = vperm.xlu0 %2385, %v600
        %v2387 = vpop.permute.xlu0 %2386
        %2390 = vset.pattern.permute.xlu0 0
        %2391 = vperm.xlu0 %2390, %v601
        %v2392 = vpop.permute.xlu0 %2391
        %2395 = vset.pattern.permute.xlu0 0
        %2396 = vperm.xlu0 %2395, %v602
        %v2397 = vpop.permute.xlu0 %2396
        %2400 = vset.pattern.permute.xlu0 0
        %2401 = vperm.xlu0 %2400, %v603
        %v2402 = vpop.permute.xlu0 %2401
        %2405 = vset.pattern.permute.xlu0 0
        %2406 = vperm.xlu0 %2405, %v604
        %v2407 = vpop.permute.xlu0 %2406
        %2410 = vset.pattern.permute.xlu0 0
        %2411 = vperm.xlu0 %2410, %v605
        %v2412 = vpop.permute.xlu0 %2411
        %2415 = vset.pattern.permute.xlu0 0
        %2416 = vperm.xlu0 %2415, %v606
        %v2417 = vpop.permute.xlu0 %2416
        %2420 = vset.pattern.permute.xlu0 0
        %2421 = vperm.xlu0 %2420, %v607
        %v2422 = vpop.permute.xlu0 %2421
        %2425 = vset.pattern.permute.xlu0 0
        %2426 = vperm.xlu0 %2425, %v608
        %v2427 = vpop.permute.xlu0 %2426
        %2430 = vset.pattern.permute.xlu0 0
        %2431 = vperm.xlu0 %2430, %v609
        %v2432 = vpop.permute.xlu0 %2431
        %2435 = vset.pattern.permute.xlu0 0
        %2436 = vperm.xlu0 %2435, %v610
        %v2437 = vpop.permute.xlu0 %2436
        %2440 = vset.pattern.permute.xlu0 0
        %2441 = vperm.xlu0 %2440, %v611
        %v2442 = vpop.permute.xlu0 %2441
        %2445 = vset.pattern.permute.xlu0 0
        %2446 = vperm.xlu0 %2445, %v612
        %v2447 = vpop.permute.xlu0 %2446
        %2450 = vset.pattern.permute.xlu0 0
        %2451 = vperm.xlu0 %2450, %v613
        %v2452 = vpop.permute.xlu0 %2451
        %2455 = vset.pattern.permute.xlu0 0
        %2456 = vperm.xlu0 %2455, %v614
        %v2457 = vpop.permute.xlu0 %2456
        %2460 = vset.pattern.permute.xlu0 0
        %2461 = vperm.xlu0 %2460, %v615
        %v2462 = vpop.permute.xlu0 %2461
        %2465 = vset.pattern.permute.xlu0 0
        %2466 = vperm.xlu0 %2465, %v616
        %v2467 = vpop.permute.xlu0 %2466
        %2470 = vset.pattern.permute.xlu0 0
        %2471 = vperm.xlu0 %2470, %v617
        %v2472 = vpop.permute.xlu0 %2471
        %2475 = vset.pattern.permute.xlu0 0
        %2476 = vperm.xlu0 %2475, %v618
        %v2477 = vpop.permute.xlu0 %2476
        %2480 = vset.pattern.permute.xlu0 0
        %2481 = vperm.xlu0 %2480, %v619
        %v2482 = vpop.permute.xlu0 %2481
        %2485 = vset.pattern.permute.xlu0 0
        %2486 = vperm.xlu0 %2485, %v620
        %v2487 = vpop.permute.xlu0 %2486
        %2490 = vset.pattern.permute.xlu0 0
        %2491 = vperm.xlu0 %2490, %v621
        %v2492 = vpop.permute.xlu0 %2491
        %2495 = vset.pattern.permute.xlu0 0
        %2496 = vperm.xlu0 %2495, %v622
        %v2497 = vpop.permute.xlu0 %2496
        %2500 = vset.pattern.permute.xlu0 0
        %2501 = vperm.xlu0 %2500, %v623
        %v2502 = vpop.permute.xlu0 %2501
        %2505 = vset.pattern.permute.xlu0 0
        %2506 = vperm.xlu0 %2505, %v624
        %v2507 = vpop.permute.xlu0 %2506
        %2510 = vset.pattern.permute.xlu0 0
        %2511 = vperm.xlu0 %2510, %v625
        %v2512 = vpop.permute.xlu0 %2511
        %2515 = vset.pattern.permute.xlu0 0
        %2516 = vperm.xlu0 %2515, %v626
        %v2517 = vpop.permute.xlu0 %2516
        %v2519 = vmul.f32 %v2263, %v2362
        %v2520 = vmul.f32 %v2264, %v2362
        %v2521 = vmul.f32 %v2265, %v2362
        %v2522 = vmul.f32 %v2266, %v2367
        %v2523 = vmul.f32 %v2267, %v2367
        %v2524 = vmul.f32 %v2268, %v2367
        %v2525 = vmul.f32 %v2269, %v2372
        %v2526 = vmul.f32 %v2270, %v2372
        %v2527 = vmul.f32 %v2271, %v2372
        %v2528 = vmul.f32 %v2272, %v2377
        %v2529 = vmul.f32 %v2273, %v2377
        %v2530 = vmul.f32 %v2274, %v2377
        %v2531 = vmul.f32 %v2275, %v2382
        %v2532 = vmul.f32 %v2276, %v2382
        %v2533 = vmul.f32 %v2277, %v2382
        %v2534 = vmul.f32 %v2278, %v2387
        %v2535 = vmul.f32 %v2279, %v2387
        %v2536 = vmul.f32 %v2280, %v2387
        %v2537 = vmul.f32 %v2281, %v2392
        %v2538 = vmul.f32 %v2282, %v2392
        %v2539 = vmul.f32 %v2283, %v2392
        %v2540 = vmul.f32 %v2284, %v2397
        %v2541 = vmul.f32 %v2285, %v2397
        %v2542 = vmul.f32 %v2286, %v2397
        %v2543 = vmul.f32 %v2287, %v2402
        %v2544 = vmul.f32 %v2288, %v2402
        %v2545 = vmul.f32 %v2289, %v2402
        %v2546 = vmul.f32 %v2290, %v2407
        %v2547 = vmul.f32 %v2291, %v2407
        %v2548 = vmul.f32 %v2292, %v2407
        %v2549 = vmul.f32 %v2293, %v2412
        %v2550 = vmul.f32 %v2294, %v2412
        %v2551 = vmul.f32 %v2295, %v2412
        %v2552 = vmul.f32 %v2296, %v2417
        %v2553 = vmul.f32 %v2297, %v2417
        %v2554 = vmul.f32 %v2298, %v2417
        %v2555 = vmul.f32 %v2299, %v2422
        %v2556 = vmul.f32 %v2300, %v2422
        %v2557 = vmul.f32 %v2301, %v2422
        %v2558 = vmul.f32 %v2302, %v2427
        %v2559 = vmul.f32 %v2303, %v2427
        %v2560 = vmul.f32 %v2304, %v2427
        %v2561 = vmul.f32 %v2305, %v2432
        %v2562 = vmul.f32 %v2306, %v2432
        %v2563 = vmul.f32 %v2307, %v2432
        %v2564 = vmul.f32 %v2308, %v2437
        %v2565 = vmul.f32 %v2309, %v2437
        %v2566 = vmul.f32 %v2310, %v2437
        %v2567 = vmul.f32 %v2311, %v2442
        %v2568 = vmul.f32 %v2312, %v2442
        %v2569 = vmul.f32 %v2313, %v2442
        %v2570 = vmul.f32 %v2314, %v2447
        %v2571 = vmul.f32 %v2315, %v2447
        %v2572 = vmul.f32 %v2316, %v2447
        %v2573 = vmul.f32 %v2317, %v2452
        %v2574 = vmul.f32 %v2318, %v2452
        %v2575 = vmul.f32 %v2319, %v2452
        %v2576 = vmul.f32 %v2320, %v2457
        %v2577 = vmul.f32 %v2321, %v2457
        %v2578 = vmul.f32 %v2322, %v2457
        %v2579 = vmul.f32 %v2323, %v2462
        %v2580 = vmul.f32 %v2324, %v2462
        %v2581 = vmul.f32 %v2325, %v2462
        %v2582 = vmul.f32 %v2326, %v2467
        %v2583 = vmul.f32 %v2327, %v2467
        %v2584 = vmul.f32 %v2328, %v2467
        %v2585 = vmul.f32 %v2329, %v2472
        %v2586 = vmul.f32 %v2330, %v2472
        %v2587 = vmul.f32 %v2331, %v2472
        %v2588 = vmul.f32 %v2332, %v2477
        %v2589 = vmul.f32 %v2333, %v2477
        %v2590 = vmul.f32 %v2334, %v2477
        %v2591 = vmul.f32 %v2335, %v2482
        %v2592 = vmul.f32 %v2336, %v2482
        %v2593 = vmul.f32 %v2337, %v2482
        %v2594 = vmul.f32 %v2338, %v2487
        %v2595 = vmul.f32 %v2339, %v2487
        %v2596 = vmul.f32 %v2340, %v2487
        %v2597 = vmul.f32 %v2341, %v2492
        %v2598 = vmul.f32 %v2342, %v2492
        %v2599 = vmul.f32 %v2343, %v2492
        %v2600 = vmul.f32 %v2344, %v2497
        %v2601 = vmul.f32 %v2345, %v2497
        %v2602 = vmul.f32 %v2346, %v2497
        %v2603 = vmul.f32 %v2347, %v2502
        %v2604 = vmul.f32 %v2348, %v2502
        %v2605 = vmul.f32 %v2349, %v2502
        %v2606 = vmul.f32 %v2350, %v2507
        %v2607 = vmul.f32 %v2351, %v2507
        %v2608 = vmul.f32 %v2352, %v2507
        %v2609 = vmul.f32 %v2353, %v2512
        %v2610 = vmul.f32 %v2354, %v2512
        %v2611 = vmul.f32 %v2355, %v2512
        %v2612 = vmul.f32 %v2356, %v2517
        %v2613 = vmul.f32 %v2357, %v2517
        %v2614 = vmul.f32 %v2358, %v2517
        %v2615 = vadd.f32 %v2519, %v2522
        %v2616 = vadd.f32 %v2615, %v2525
        %v2617 = vadd.f32 %v2616, %v2528
        %v2618 = vadd.f32 %v2617, %v2531
        %v2619 = vadd.f32 %v2618, %v2534
        %v2620 = vadd.f32 %v2619, %v2537
        %v2621 = vadd.f32 %v2620, %v2540
        %v2622 = vadd.f32 %v2621, %v2543
        %v2623 = vadd.f32 %v2622, %v2546
        %v2624 = vadd.f32 %v2623, %v2549
        %v2625 = vadd.f32 %v2624, %v2552
        %v2626 = vadd.f32 %v2625, %v2555
        %v2627 = vadd.f32 %v2626, %v2558
        %v2628 = vadd.f32 %v2627, %v2561
        %v2629 = vadd.f32 %v2628, %v2564
        %v2630 = vadd.f32 %v2629, %v2567
        %v2631 = vadd.f32 %v2630, %v2570
        %v2632 = vadd.f32 %v2631, %v2573
        %v2633 = vadd.f32 %v2632, %v2576
        %v2634 = vadd.f32 %v2633, %v2579
        %v2635 = vadd.f32 %v2634, %v2582
        %v2636 = vadd.f32 %v2635, %v2585
        %v2637 = vadd.f32 %v2636, %v2588
        %v2638 = vadd.f32 %v2637, %v2591
        %v2639 = vadd.f32 %v2638, %v2594
        %v2640 = vadd.f32 %v2639, %v2597
        %v2641 = vadd.f32 %v2640, %v2600
        %v2642 = vadd.f32 %v2641, %v2603
        %v2643 = vadd.f32 %v2642, %v2606
        %v2644 = vadd.f32 %v2643, %v2609
        %v2645 = vadd.f32 %v2644, %v2612
        %v2646 = vrot.slane %v2645, 4
        %v2647 = vadd.f32 %v2645, %v2646
        %v2648 = vrot.slane %v2647, 2
        %v2649 = vadd.f32 %v2647, %v2648
        %v2650 = vrot.slane %v2649, 1
        %v2651 = vadd.f32 %v2649, %v2650
        %v2652 = vadd.f32 %v2520, %v2523
        %v2653 = vadd.f32 %v2652, %v2526
        %v2654 = vadd.f32 %v2653, %v2529
        %v2655 = vadd.f32 %v2654, %v2532
        %v2656 = vadd.f32 %v2655, %v2535
        %v2657 = vadd.f32 %v2656, %v2538
        %v2658 = vadd.f32 %v2657, %v2541
        %v2659 = vadd.f32 %v2658, %v2544
        %v2660 = vadd.f32 %v2659, %v2547
        %v2661 = vadd.f32 %v2660, %v2550
        %v2662 = vadd.f32 %v2661, %v2553
        %v2663 = vadd.f32 %v2662, %v2556
        %v2664 = vadd.f32 %v2663, %v2559
        %v2665 = vadd.f32 %v2664, %v2562
        %v2666 = vadd.f32 %v2665, %v2565
        %v2667 = vadd.f32 %v2666, %v2568
        %v2668 = vadd.f32 %v2667, %v2571
        %v2669 = vadd.f32 %v2668, %v2574
        %v2670 = vadd.f32 %v2669, %v2577
        %v2671 = vadd.f32 %v2670, %v2580
        %v2672 = vadd.f32 %v2671, %v2583
        %v2673 = vadd.f32 %v2672, %v2586
        %v2674 = vadd.f32 %v2673, %v2589
        %v2675 = vadd.f32 %v2674, %v2592
        %v2676 = vadd.f32 %v2675, %v2595
        %v2677 = vadd.f32 %v2676, %v2598
        %v2678 = vadd.f32 %v2677, %v2601
        %v2679 = vadd.f32 %v2678, %v2604
        %v2680 = vadd.f32 %v2679, %v2607
        %v2681 = vadd.f32 %v2680, %v2610
        %v2682 = vadd.f32 %v2681, %v2613
        %v2683 = vrot.slane %v2682, 4
        %v2684 = vadd.f32 %v2682, %v2683
        %v2685 = vrot.slane %v2684, 2
        %v2686 = vadd.f32 %v2684, %v2685
        %v2687 = vrot.slane %v2686, 1
        %v2688 = vadd.f32 %v2686, %v2687
        %v2689 = vadd.f32 %v2521, %v2524
        %v2690 = vadd.f32 %v2689, %v2527
        %v2691 = vadd.f32 %v2690, %v2530
        %v2692 = vadd.f32 %v2691, %v2533
        %v2693 = vadd.f32 %v2692, %v2536
        %v2694 = vadd.f32 %v2693, %v2539
        %v2695 = vadd.f32 %v2694, %v2542
        %v2696 = vadd.f32 %v2695, %v2545
        %v2697 = vadd.f32 %v2696, %v2548
        %v2698 = vadd.f32 %v2697, %v2551
        %v2699 = vadd.f32 %v2698, %v2554
        %v2700 = vadd.f32 %v2699, %v2557
        %v2701 = vadd.f32 %v2700, %v2560
        %v2702 = vadd.f32 %v2701, %v2563
        %v2703 = vadd.f32 %v2702, %v2566
        %v2704 = vadd.f32 %v2703, %v2569
        %v2705 = vadd.f32 %v2704, %v2572
        %v2706 = vadd.f32 %v2705, %v2575
        %v2707 = vadd.f32 %v2706, %v2578
        %v2708 = vadd.f32 %v2707, %v2581
        %v2709 = vadd.f32 %v2708, %v2584
        %v2710 = vadd.f32 %v2709, %v2587
        %v2711 = vadd.f32 %v2710, %v2590
        %v2712 = vadd.f32 %v2711, %v2593
        %v2713 = vadd.f32 %v2712, %v2596
        %v2714 = vadd.f32 %v2713, %v2599
        %v2715 = vadd.f32 %v2714, %v2602
        %v2716 = vadd.f32 %v2715, %v2605
        %v2717 = vadd.f32 %v2716, %v2608
        %v2718 = vadd.f32 %v2717, %v2611
        %v2719 = vadd.f32 %v2718, %v2614
        %v2720 = vrot.slane %v2719, 4
        %v2721 = vadd.f32 %v2719, %v2720
        %v2722 = vrot.slane %v2721, 2
        %v2723 = vadd.f32 %v2721, %v2722
        %v2724 = vrot.slane %v2723, 1
        %v2725 = vadd.f32 %v2723, %v2724
        %s2726 = sld [smem:[#allocation2]]
        %v2727 = vstv %s2726
        %v2728 = vadd.f32 %v2651, %v2727
        %v2729 = vadd.f32 %v2688, %v2727
        %v2730 = vadd.f32 %v2725, %v2727
        %v2734 = vrot.slane %v2729, 7
        %v2735 = vrot.slane %v2730, 6
        %vm2736 = vcmask 1040384
        %v2737 = vsel %vm2736, %v2728, %v2734
        %vm2738 = vcmask 1041408
        %v2739 = vsel %vm2738, %v2737, %v2735
        %v2741 = vlaneseq
        %vm2742 = vcmp.ge.s32.totalorder %v2741, 0
        %vm2743 = vcmp.lt.s32.totalorder %v2741, 384
        %vm2744 = vmand %vm2742, %vm2743
        %2745 = vst.msk [vmem:[%s518] sm:$0x7] %vm2744, %v2739
        %s2746 = sand.u32 %s138, 1
        %s2747 = scalar_lea.sflag [#allocation5], %s2746
        %s2748 = sand.u32 %s138, 1
        %s2749 = smul.addr %s2748, 3
        %s2750 = scalar_lea.vmem [#allocation4], %s2749
        // Predicated region
        $region107: #{qnetwork_forward.1} parent=101 // pred_check
          %p2751 = pneg %p148
        $region108: #{qnetwork_forward.1} parent=101 // pred_check_branch
          %2753 = sbr.rel (%p2751) target = $region110
        $region109: #{qnetwork_forward.1} parent=101 // pred_region
          %s2754 = smul.u32 3, %s20
          %s2755 = ssub.s32 5, %s2754
          %p2756 = scmp.lt.s32.totalorder %s2755, 3
          %s2757 = scalar_select %p2756, %s2755, 3
          %s2758 = ssub.s32 3, %s2757
          %s2759 = sshll.u32 %s2758, 4
          %2760 = vsyncadd %s2747, %s2759
          %p2761 = scmp.ne.s32.totalorder 0, %s2757
          %s2762 = scalar_lea.hbm %s5, %s2754
          %s2763 = sshll.u32 %s2757, 4
          %s2764 = sshll.u32 %s2750, 4
          %s2765 = int_to_ptr.vmem [resolvable:$true] %s2764
          %s2766 = sshll.u32 %s2762, 4
          %s2767 = int_to_ptr.hbm [resolvable:$true] %s2766
          %2769 = dma.vmem_to_hbm [thread:$0]  (%p2761), %s2765, %s2763, %s2767, %s2747
        $region110: #{qnetwork_forward.1} parent=101 // pred_fallthru
          _
      $region102: #{qnetwork_forward.1} parent=5 // pred_fallthru
        _
      %p2770 = scmp.le.s32.totalorder 2, %s15
      // Predicated region
      $region111: #{qnetwork_forward.1} parent=5 // pred_check
        %p2771 = pneg %p2770
      $region112: #{qnetwork_forward.1} parent=5 // pred_check_branch
        %2773 = sbr.rel (%p2771) target = $region114
      $region113: #{qnetwork_forward.1} parent=5 // pred_region
        %s2774 = ssub.s32 %s15, 2
        // Predicated region
        $region115: #{qnetwork_forward.1} parent=113 // pred_check
          %p2775 = pneg %p154
        $region116: #{qnetwork_forward.1} parent=113 // pred_check_branch
          %2777 = sbr.rel (%p2775) target = $region118
        $region117: #{qnetwork_forward.1} parent=113 // pred_region
          %s2778 = sand.u32 %s139, 1
          %s2779 = scalar_lea.sflag [#allocation5], %s2778
          %s2780 = sand.u32 %s139, 1
          %s2781 = smul.addr %s2780, 3
          %s2782 = scalar_lea.vmem [#allocation4], %s2781
          %2784 = dma.done %s2779, 48
        $region118: #{qnetwork_forward.1} parent=113 // pred_fallthru
          _
      $region114: #{qnetwork_forward.1} parent=5 // pred_fallthru
        _
    $region6: #{qnetwork_forward.1} parent=1 // loop_footer
      %s19 = sadd.s32 1, %s15
    $region7: #{qnetwork_forward.1} parent=1 // loop_footer_branch
      %14 = sbr.rel target = $region3
    $region8: #{qnetwork_forward.1} parent=1 // loop_exit
      _
    %2785 = vsyncpa [#allocation5], 1
    %s2786 = scalar_lea.sflag [#allocation5], 1
    %2787 = vsyncpa %s2786, 1

</llo_original>
